<compile_context>
chip_gen: v7x
topology: tpu7x:2x2x1
jax: 0.10.0
libtpu: 0.0.40
codegen_flags: <defaults>
</compile_context>

<pallas_src>
import jax
import jax.numpy as jnp
from jax import lax
from jax.experimental import pallas as pl
from jax.experimental.pallas import tpu as pltpu

EMBEDDING_DIM = 8
HIDDEN_SIZE = 32
N_LAYERS = 2
DROPOUT_PROB = 0.1   # nn.Dropout in eval mode == identity
LABEL_SIZE = 1
LN_EPS = 1e-5
_UNROLL_T = 32       # fully unroll the time loop up to this sequence length
_OUT_SUBLANES = 8    # sublane-padded, lane-dense output block


def make_kernel(n_layers, T, TB, H):
    def kernel(*refs):
        pre_ref = refs[0]                      # (T, TB, H): x @ w_ih0 + b0 (precomputed in XLA)
        w_hh0_ref = refs[1]                    # (H, H)
        idx = 2
        layer_refs = []
        for _ in range(n_layers - 1):
            layer_refs.append((refs[idx], refs[idx + 1], refs[idx + 2]))  # (H,H), (H,H), (1,H)
            idx += 3
        gamma_ref, beta_ref, wfc_ref, bfc_ref = refs[idx:idx + 4]
        out_ref = refs[idx + 4]                # (8, TB) lane-dense output block

        # Hoisted weight loads / bias broadcasts (JAX does not CSE broadcasts).
        # NOTE: weights could be cast to bf16 (f32 accumulation) for fewer MXU
        # passes on v6e/v7x; kept f32 here to stay well inside the reference
        # tolerance.
        w_hh0 = w_hh0_ref[...]
        layers = [(wi_ref[...], wh_ref[...], jnp.broadcast_to(b_ref[...], (TB, H)))
                  for (wi_ref, wh_ref, b_ref) in layer_refs]

        def step(pre_t, hs):
            # Layer 0: only the recurrent dot sits on the serial tanh chain.
            h0 = jnp.tanh(pre_t + jnp.dot(hs[0], w_hh0,
                                          preferred_element_type=jnp.float32))
            new = [h0]
            # Layers >= 1: two independent MXU dots issued back-to-back; no
            # per-step concatenate / lane relayout on the critical path.
            for l in range(1, n_layers):
                w_ih, w_hh, b_l = layers[l - 1]
                hl = jnp.tanh(
                    jnp.dot(new[l - 1], w_ih, preferred_element_type=jnp.float32)
                    + jnp.dot(hs[l], w_hh, preferred_element_type=jnp.float32)
                    + b_l)
                new.append(hl)
            return new

        h = [jnp.zeros((TB, H), jnp.float32) for _ in range(n_layers)]
        if T <= _UNROLL_T:
            # Full static unroll: the LLO scheduler sees across steps, so the
            # independent layer-0[t+1] / layer-1[t] pushes can interleave
            # (wavefront) without manual statement reordering.
            for t in range(T):
                h = step(pre_ref[t], h)
        else:
            # Long sequences: bounded live ranges; `pre` stays in the pipelined
            # input block, moderate unroll keeps scheduler visibility.
            def body(t, hs):
                return tuple(step(pre_ref[t], list(hs)))
            h = list(lax.fori_loop(0, T, body, tuple(h), unroll=4))

        # ---- LayerNorm on the last-timestep hidden state of the top layer ----
        last = h[n_layers - 1]
        mean = jnp.mean(last, axis=-1, keepdims=True)
        var = jnp.mean((last - mean) ** 2, axis=-1, keepdims=True)
        normed = (last - mean) * lax.rsqrt(var + LN_EPS)
        normed = normed * gamma_ref[...] + beta_ref[...]

        # Dropout: eval mode -> identity.
        # TODO(synk): training-mode dropout (pltpu.prng_random_bits mask) not wired in.

        # ---- Linear(H, 1), produced lane-dense: batch along lanes, result
        # broadcast across the 8 sublanes of the output block (avoids masked
        # (TB, 1) partial stores / strided writeback). Off the critical path.
        wfc8 = jnp.broadcast_to(wfc_ref[...], (_OUT_SUBLANES, H))       # (8, H)
        rows = lax.dot_general(wfc8, normed, (((1,), (1,)), ((), ())),
                               preferred_element_type=jnp.float32)      # (8, TB)
        out_ref[...] = (rows + bfc_ref[...]).astype(out_ref.dtype)

    return kernel


def weather_forecast_forward(x, params):
    """x: (B, T, E) batch-first float32, as in the PyTorch module."""
    B, T, E = x.shape
    H = HIDDEN_SIZE
    n_layers = len(params["rnn"])

    # ---- layer-0 input projection hoisted out of the kernel (plain XLA) ----
    w_ih0, w_hh0, b0 = params["rnn"][0]
    x_tm = jnp.transpose(x, (1, 0, 2))                               # (T, B, E)
    pre = jnp.einsum("tbe,eh->tbh", x_tm, w_ih0,
                     precision=lax.Precision.HIGHEST) + b0           # (T, B, H)

    inputs = [pre, w_hh0]
    for (w_ih, w_hh, b) in params["rnn"][1:]:
        inputs += [w_ih, w_hh, b]
    w_fc_row = jnp.transpose(params["w_fc"])                         # (1, H)
    inputs += [params["gamma"], params["beta"], w_fc_row, params["b_fc"]]

    # Batch tiling: single tile at small B; for larger B split so the grid has
    # >= 2 "parallel" tiles (v7x dual TensorCore) while keeping M per tile
    # large (v6e MXU fill). Do not shrink TB for VMEM — not binding here.
    if B <= 16:
        TB = B
    else:
        TB = min(128, ((pl.cdiv(B, 2) + 7) // 8) * 8)
    num_tiles = pl.cdiv(B, TB)
    grid = (num_tiles,)

    def resident(arr):
        # Full-array block, same block index every grid step -> stays in VMEM.
        return pl.BlockSpec(arr.shape, lambda i, n=arr.ndim: (0,) * n)

    in_specs = [pl.BlockSpec((T, TB, H), lambda i: (0, i, 0))]
    in_specs += [resident(a) for a in inputs[1:]]
    # Lane-dense output: (8, TB) block per batch tile; row 0 holds the result.
    out_specs = pl.BlockSpec((_OUT_SUBLANES, TB), lambda i: (i, 0))

    kernel = make_kernel(n_layers, T, TB, H)
    out_tiles = pl.pallas_call(
        kernel,
        out_shape=jax.ShapeDtypeStruct((num_tiles * _OUT_SUBLANES, TB), jnp.float32),
        grid=grid,
        in_specs=in_specs,
        out_specs=out_specs,
        compiler_params=pltpu.CompilerParams(
            dimension_semantics=("parallel",)),
    )(*inputs)

    # Extract row 0 of each tile; trailing padded rows (B not multiple of TB)
    # are computed on garbage batch rows but sliced off here (rows independent).
    out = out_tiles.reshape(num_tiles, _OUT_SUBLANES, TB)[:, 0, :]
    return out.reshape(num_tiles * TB)[:B].reshape(B, LABEL_SIZE)


def init_params(key, E, H, n_layers):
    """Deterministic init mirroring PyTorch's uniform(-1/sqrt(H), 1/sqrt(H)) for RNN/Linear."""
    bound = 1.0 / jnp.sqrt(jnp.float32(H))
    keys = jax.random.split(key, 4 * n_layers + 2)
    rnn_layers = []
    ki = 0
    for l in range(n_layers):
        in_dim = E if l == 0 else H
        w_ih = jax.random.uniform(keys[ki], (in_dim, H), jnp.float32, -bound, bound); ki += 1
        w_hh = jax.random.uniform(keys[ki], (H, H), jnp.float32, -bound, bound); ki += 1
        b_ih = jax.random.uniform(keys[ki], (1, H), jnp.float32, -bound, bound); ki += 1
        b_hh = jax.random.uniform(keys[ki], (1, H), jnp.float32, -bound, bound); ki += 1
        rnn_layers.append((w_ih, w_hh, b_ih + b_hh))
    w_fc = jax.random.uniform(keys[ki], (H, LABEL_SIZE), jnp.float32, -bound, bound); ki += 1
    b_fc = jax.random.uniform(keys[ki], (1, LABEL_SIZE), jnp.float32, -bound, bound); ki += 1
    return {
        "rnn": rnn_layers,
        "gamma": jnp.ones((1, H), jnp.float32),
        "beta": jnp.zeros((1, H), jnp.float32),
        "w_fc": w_fc,
        "b_fc": b_fc,
    }


def reference_forward(x, params):
    """Pure-JAX reference of the PyTorch forward (eval mode)."""
    h_seq = x
    for (w_ih, w_hh, b) in params["rnn"]:
        B, T, _ = h_seq.shape
        h = jnp.zeros((B, HIDDEN_SIZE), jnp.float32)
        outs = []
        for t in range(T):
            h = jnp.tanh(h_seq[:, t, :] @ w_ih + h @ w_hh + b)
            outs.append(h)
        h_seq = jnp.stack(outs, axis=1)
    last = h_seq[:, -1, :]
    mean = jnp.mean(last, axis=-1, keepdims=True)
    var = jnp.mean((last - mean) ** 2, axis=-1, keepdims=True)
    normed = (last - mean) / jnp.sqrt(var + LN_EPS)
    normed = normed * params["gamma"] + params["beta"]
    return normed @ params["w_fc"] + params["b_fc"]


if __name__ == "__main__":
    key = jax.random.PRNGKey(0)
    k_param, k_x = jax.random.split(key)

    B, T = 2, 8
    x = jax.random.normal(k_x, (B, T, EMBEDDING_DIM), jnp.float32)
    params = init_params(k_param, EMBEDDING_DIM, HIDDEN_SIZE, N_LAYERS)

    out = weather_forecast_forward(x, params)
    out = jax.block_until_ready(out)

    ref = reference_forward(x, params)
    assert out.shape == (B, LABEL_SIZE)
    assert jnp.allclose(out, ref, rtol=2e-4, atol=2e-5), (out, ref)

    print("KERNEL_OK")
</pallas_src>

<mosaic_0001>
module attributes {stable_mosaic.version = 11 : i64} {
  func.func @kernel(%arg0: i32, %arg1: memref<8x2x32xf32, #tpu.memory_space<vmem>>, %arg2: memref<32x32xf32, #tpu.memory_space<vmem>>, %arg3: memref<32x32xf32, #tpu.memory_space<vmem>>, %arg4: memref<32x32xf32, #tpu.memory_space<vmem>>, %arg5: memref<1x32xf32, #tpu.memory_space<vmem>>, %arg6: memref<1x32xf32, #tpu.memory_space<vmem>>, %arg7: memref<1x32xf32, #tpu.memory_space<vmem>>, %arg8: memref<1x32xf32, #tpu.memory_space<vmem>>, %arg9: memref<1x1xf32, #tpu.memory_space<vmem>>, %arg10: memref<8x2xf32, #tpu.memory_space<vmem>>) attributes {dimension_semantics = [#tpu.dimension_semantics<parallel>], iteration_bounds = array<i64: 1>, scalar_prefetch = 0 : i64, scratch_operands = 0 : i64, tpu.core_type = #tpu.core_type<tc>, window_params = [{transform_indices = @transform_0, window_bounds = array<i64: 8, 2, 32>}, {pipeline_mode = #tpu.pipeline_mode<synchronous>, transform_indices = @transform_1, window_bounds = array<i64: 32, 32>}, {pipeline_mode = #tpu.pipeline_mode<synchronous>, transform_indices = @transform_2, window_bounds = array<i64: 32, 32>}, {pipeline_mode = #tpu.pipeline_mode<synchronous>, transform_indices = @transform_3, window_bounds = array<i64: 32, 32>}, {pipeline_mode = #tpu.pipeline_mode<synchronous>, transform_indices = @transform_4, window_bounds = array<i64: 1, 32>}, {pipeline_mode = #tpu.pipeline_mode<synchronous>, transform_indices = @transform_5, window_bounds = array<i64: 1, 32>}, {pipeline_mode = #tpu.pipeline_mode<synchronous>, transform_indices = @transform_6, window_bounds = array<i64: 1, 32>}, {pipeline_mode = #tpu.pipeline_mode<synchronous>, transform_indices = @transform_7, window_bounds = array<i64: 1, 32>}, {pipeline_mode = #tpu.pipeline_mode<synchronous>, transform_indices = @transform_8, window_bounds = array<i64: 1, 1>}, {transform_indices = @transform_9, window_bounds = array<i64: 8, 2>}]} {
    %c0 = arith.constant 0 : index
    %c0_0 = arith.constant 0 : index
    %0 = vector.load %arg2[%c0, %c0_0] : memref<32x32xf32, #tpu.memory_space<vmem>>, vector<32x32xf32>
    %c0_1 = arith.constant 0 : index
    %c0_2 = arith.constant 0 : index
    %1 = vector.load %arg3[%c0_1, %c0_2] : memref<32x32xf32, #tpu.memory_space<vmem>>, vector<32x32xf32>
    %c0_3 = arith.constant 0 : index
    %c0_4 = arith.constant 0 : index
    %2 = vector.load %arg4[%c0_3, %c0_4] : memref<32x32xf32, #tpu.memory_space<vmem>>, vector<32x32xf32>
    %c0_5 = arith.constant 0 : index
    %c0_6 = arith.constant 0 : index
    %3 = vector.load %arg5[%c0_5, %c0_6] : memref<1x32xf32, #tpu.memory_space<vmem>>, vector<1x32xf32>
    %4 = vector.shape_cast %3 : vector<1x32xf32> to vector<1x32xf32>
    %5 = vector.broadcast %4 : vector<1x32xf32> to vector<2x32xf32>
    %cst = arith.constant 0.000000e+00 : f32
    %6 = vector.broadcast %cst : f32 to vector<2x32xf32>
    %cst_7 = arith.constant 0.000000e+00 : f32
    %7 = vector.broadcast %cst_7 : f32 to vector<2x32xf32>
    %c0_8 = arith.constant 0 : index
    %c0_9 = arith.constant 0 : index
    %c0_10 = arith.constant 0 : index
    %8 = vector.load %arg1[%c0_8, %c0_9, %c0_10] : memref<8x2x32xf32, #tpu.memory_space<vmem>>, vector<1x2x32xf32>
    %9 = vector.shape_cast %8 : vector<1x2x32xf32> to vector<2x32xf32>
    %cst_11 = arith.constant dense<0.000000e+00> : vector<2x32xf32>
    %10 = tpu.matmul %6, %0, %cst_11 {dimension_numbers = #tpu.dot_dimension_numbers<[1], [0], [0], [1], [0, 0, 1, 1], [], []>} : vector<2x32xf32>, vector<32x32xf32>, vector<2x32xf32> -> vector<2x32xf32>
    %11 = arith.addf %9, %10 : vector<2x32xf32>
    %12 = math.tanh %11 : vector<2x32xf32>
    %cst_12 = arith.constant dense<0.000000e+00> : vector<2x32xf32>
    %13 = tpu.matmul %12, %1, %cst_12 {dimension_numbers = #tpu.dot_dimension_numbers<[1], [0], [0], [1], [0, 0, 1, 1], [], []>} : vector<2x32xf32>, vector<32x32xf32>, vector<2x32xf32> -> vector<2x32xf32>
    %cst_13 = arith.constant dense<0.000000e+00> : vector<2x32xf32>
    %14 = tpu.matmul %7, %2, %cst_13 {dimension_numbers = #tpu.dot_dimension_numbers<[1], [0], [0], [1], [0, 0, 1, 1], [], []>} : vector<2x32xf32>, vector<32x32xf32>, vector<2x32xf32> -> vector<2x32xf32>
    %15 = arith.addf %13, %14 : vector<2x32xf32>
    %16 = arith.addf %15, %5 : vector<2x32xf32>
    %17 = math.tanh %16 : vector<2x32xf32>
    %c1 = arith.constant 1 : index
    %c0_14 = arith.constant 0 : index
    %c0_15 = arith.constant 0 : index
    %18 = vector.load %arg1[%c1, %c0_14, %c0_15] : memref<8x2x32xf32, #tpu.memory_space<vmem>>, vector<1x2x32xf32>
    %19 = vector.shape_cast %18 : vector<1x2x32xf32> to vector<2x32xf32>
    %cst_16 = arith.constant dense<0.000000e+00> : vector<2x32xf32>
    %20 = tpu.matmul %12, %0, %cst_16 {dimension_numbers = #tpu.dot_dimension_numbers<[1], [0], [0], [1], [0, 0, 1, 1], [], []>} : vector<2x32xf32>, vector<32x32xf32>, vector<2x32xf32> -> vector<2x32xf32>
    %21 = arith.addf %19, %20 : vector<2x32xf32>
    %22 = math.tanh %21 : vector<2x32xf32>
    %cst_17 = arith.constant dense<0.000000e+00> : vector<2x32xf32>
    %23 = tpu.matmul %22, %1, %cst_17 {dimension_numbers = #tpu.dot_dimension_numbers<[1], [0], [0], [1], [0, 0, 1, 1], [], []>} : vector<2x32xf32>, vector<32x32xf32>, vector<2x32xf32> -> vector<2x32xf32>
    %cst_18 = arith.constant dense<0.000000e+00> : vector<2x32xf32>
    %24 = tpu.matmul %17, %2, %cst_18 {dimension_numbers = #tpu.dot_dimension_numbers<[1], [0], [0], [1], [0, 0, 1, 1], [], []>} : vector<2x32xf32>, vector<32x32xf32>, vector<2x32xf32> -> vector<2x32xf32>
    %25 = arith.addf %23, %24 : vector<2x32xf32>
    %26 = arith.addf %25, %5 : vector<2x32xf32>
    %27 = math.tanh %26 : vector<2x32xf32>
    %c2 = arith.constant 2 : index
    %c0_19 = arith.constant 0 : index
    %c0_20 = arith.constant 0 : index
    %28 = vector.load %arg1[%c2, %c0_19, %c0_20] : memref<8x2x32xf32, #tpu.memory_space<vmem>>, vector<1x2x32xf32>
    %29 = vector.shape_cast %28 : vector<1x2x32xf32> to vector<2x32xf32>
    %cst_21 = arith.constant dense<0.000000e+00> : vector<2x32xf32>
    %30 = tpu.matmul %22, %0, %cst_21 {dimension_numbers = #tpu.dot_dimension_numbers<[1], [0], [0], [1], [0, 0, 1, 1], [], []>} : vector<2x32xf32>, vector<32x32xf32>, vector<2x32xf32> -> vector<2x32xf32>
    %31 = arith.addf %29, %30 : vector<2x32xf32>
    %32 = math.tanh %31 : vector<2x32xf32>
    %cst_22 = arith.constant dense<0.000000e+00> : vector<2x32xf32>
    %33 = tpu.matmul %32, %1, %cst_22 {dimension_numbers = #tpu.dot_dimension_numbers<[1], [0], [0], [1], [0, 0, 1, 1], [], []>} : vector<2x32xf32>, vector<32x32xf32>, vector<2x32xf32> -> vector<2x32xf32>
    %cst_23 = arith.constant dense<0.000000e+00> : vector<2x32xf32>
    %34 = tpu.matmul %27, %2, %cst_23 {dimension_numbers = #tpu.dot_dimension_numbers<[1], [0], [0], [1], [0, 0, 1, 1], [], []>} : vector<2x32xf32>, vector<32x32xf32>, vector<2x32xf32> -> vector<2x32xf32>
    %35 = arith.addf %33, %34 : vector<2x32xf32>
    %36 = arith.addf %35, %5 : vector<2x32xf32>
    %37 = math.tanh %36 : vector<2x32xf32>
    %c3 = arith.constant 3 : index
    %c0_24 = arith.constant 0 : index
    %c0_25 = arith.constant 0 : index
    %38 = vector.load %arg1[%c3, %c0_24, %c0_25] : memref<8x2x32xf32, #tpu.memory_space<vmem>>, vector<1x2x32xf32>
    %39 = vector.shape_cast %38 : vector<1x2x32xf32> to vector<2x32xf32>
    %cst_26 = arith.constant dense<0.000000e+00> : vector<2x32xf32>
    %40 = tpu.matmul %32, %0, %cst_26 {dimension_numbers = #tpu.dot_dimension_numbers<[1], [0], [0], [1], [0, 0, 1, 1], [], []>} : vector<2x32xf32>, vector<32x32xf32>, vector<2x32xf32> -> vector<2x32xf32>
    %41 = arith.addf %39, %40 : vector<2x32xf32>
    %42 = math.tanh %41 : vector<2x32xf32>
    %cst_27 = arith.constant dense<0.000000e+00> : vector<2x32xf32>
    %43 = tpu.matmul %42, %1, %cst_27 {dimension_numbers = #tpu.dot_dimension_numbers<[1], [0], [0], [1], [0, 0, 1, 1], [], []>} : vector<2x32xf32>, vector<32x32xf32>, vector<2x32xf32> -> vector<2x32xf32>
    %cst_28 = arith.constant dense<0.000000e+00> : vector<2x32xf32>
    %44 = tpu.matmul %37, %2, %cst_28 {dimension_numbers = #tpu.dot_dimension_numbers<[1], [0], [0], [1], [0, 0, 1, 1], [], []>} : vector<2x32xf32>, vector<32x32xf32>, vector<2x32xf32> -> vector<2x32xf32>
    %45 = arith.addf %43, %44 : vector<2x32xf32>
    %46 = arith.addf %45, %5 : vector<2x32xf32>
    %47 = math.tanh %46 : vector<2x32xf32>
    %c4 = arith.constant 4 : index
    %c0_29 = arith.constant 0 : index
    %c0_30 = arith.constant 0 : index
    %48 = vector.load %arg1[%c4, %c0_29, %c0_30] : memref<8x2x32xf32, #tpu.memory_space<vmem>>, vector<1x2x32xf32>
    %49 = vector.shape_cast %48 : vector<1x2x32xf32> to vector<2x32xf32>
    %cst_31 = arith.constant dense<0.000000e+00> : vector<2x32xf32>
    %50 = tpu.matmul %42, %0, %cst_31 {dimension_numbers = #tpu.dot_dimension_numbers<[1], [0], [0], [1], [0, 0, 1, 1], [], []>} : vector<2x32xf32>, vector<32x32xf32>, vector<2x32xf32> -> vector<2x32xf32>
    %51 = arith.addf %49, %50 : vector<2x32xf32>
    %52 = math.tanh %51 : vector<2x32xf32>
    %cst_32 = arith.constant dense<0.000000e+00> : vector<2x32xf32>
    %53 = tpu.matmul %52, %1, %cst_32 {dimension_numbers = #tpu.dot_dimension_numbers<[1], [0], [0], [1], [0, 0, 1, 1], [], []>} : vector<2x32xf32>, vector<32x32xf32>, vector<2x32xf32> -> vector<2x32xf32>
    %cst_33 = arith.constant dense<0.000000e+00> : vector<2x32xf32>
    %54 = tpu.matmul %47, %2, %cst_33 {dimension_numbers = #tpu.dot_dimension_numbers<[1], [0], [0], [1], [0, 0, 1, 1], [], []>} : vector<2x32xf32>, vector<32x32xf32>, vector<2x32xf32> -> vector<2x32xf32>
    %55 = arith.addf %53, %54 : vector<2x32xf32>
    %56 = arith.addf %55, %5 : vector<2x32xf32>
    %57 = math.tanh %56 : vector<2x32xf32>
    %c5 = arith.constant 5 : index
    %c0_34 = arith.constant 0 : index
    %c0_35 = arith.constant 0 : index
    %58 = vector.load %arg1[%c5, %c0_34, %c0_35] : memref<8x2x32xf32, #tpu.memory_space<vmem>>, vector<1x2x32xf32>
    %59 = vector.shape_cast %58 : vector<1x2x32xf32> to vector<2x32xf32>
    %cst_36 = arith.constant dense<0.000000e+00> : vector<2x32xf32>
    %60 = tpu.matmul %52, %0, %cst_36 {dimension_numbers = #tpu.dot_dimension_numbers<[1], [0], [0], [1], [0, 0, 1, 1], [], []>} : vector<2x32xf32>, vector<32x32xf32>, vector<2x32xf32> -> vector<2x32xf32>
    %61 = arith.addf %59, %60 : vector<2x32xf32>
    %62 = math.tanh %61 : vector<2x32xf32>
    %cst_37 = arith.constant dense<0.000000e+00> : vector<2x32xf32>
    %63 = tpu.matmul %62, %1, %cst_37 {dimension_numbers = #tpu.dot_dimension_numbers<[1], [0], [0], [1], [0, 0, 1, 1], [], []>} : vector<2x32xf32>, vector<32x32xf32>, vector<2x32xf32> -> vector<2x32xf32>
    %cst_38 = arith.constant dense<0.000000e+00> : vector<2x32xf32>
    %64 = tpu.matmul %57, %2, %cst_38 {dimension_numbers = #tpu.dot_dimension_numbers<[1], [0], [0], [1], [0, 0, 1, 1], [], []>} : vector<2x32xf32>, vector<32x32xf32>, vector<2x32xf32> -> vector<2x32xf32>
    %65 = arith.addf %63, %64 : vector<2x32xf32>
    %66 = arith.addf %65, %5 : vector<2x32xf32>
    %67 = math.tanh %66 : vector<2x32xf32>
    %c6 = arith.constant 6 : index
    %c0_39 = arith.constant 0 : index
    %c0_40 = arith.constant 0 : index
    %68 = vector.load %arg1[%c6, %c0_39, %c0_40] : memref<8x2x32xf32, #tpu.memory_space<vmem>>, vector<1x2x32xf32>
    %69 = vector.shape_cast %68 : vector<1x2x32xf32> to vector<2x32xf32>
    %cst_41 = arith.constant dense<0.000000e+00> : vector<2x32xf32>
    %70 = tpu.matmul %62, %0, %cst_41 {dimension_numbers = #tpu.dot_dimension_numbers<[1], [0], [0], [1], [0, 0, 1, 1], [], []>} : vector<2x32xf32>, vector<32x32xf32>, vector<2x32xf32> -> vector<2x32xf32>
    %71 = arith.addf %69, %70 : vector<2x32xf32>
    %72 = math.tanh %71 : vector<2x32xf32>
    %cst_42 = arith.constant dense<0.000000e+00> : vector<2x32xf32>
    %73 = tpu.matmul %72, %1, %cst_42 {dimension_numbers = #tpu.dot_dimension_numbers<[1], [0], [0], [1], [0, 0, 1, 1], [], []>} : vector<2x32xf32>, vector<32x32xf32>, vector<2x32xf32> -> vector<2x32xf32>
    %cst_43 = arith.constant dense<0.000000e+00> : vector<2x32xf32>
    %74 = tpu.matmul %67, %2, %cst_43 {dimension_numbers = #tpu.dot_dimension_numbers<[1], [0], [0], [1], [0, 0, 1, 1], [], []>} : vector<2x32xf32>, vector<32x32xf32>, vector<2x32xf32> -> vector<2x32xf32>
    %75 = arith.addf %73, %74 : vector<2x32xf32>
    %76 = arith.addf %75, %5 : vector<2x32xf32>
    %77 = math.tanh %76 : vector<2x32xf32>
    %c7 = arith.constant 7 : index
    %c0_44 = arith.constant 0 : index
    %c0_45 = arith.constant 0 : index
    %78 = vector.load %arg1[%c7, %c0_44, %c0_45] : memref<8x2x32xf32, #tpu.memory_space<vmem>>, vector<1x2x32xf32>
    %79 = vector.shape_cast %78 : vector<1x2x32xf32> to vector<2x32xf32>
    %cst_46 = arith.constant dense<0.000000e+00> : vector<2x32xf32>
    %80 = tpu.matmul %72, %0, %cst_46 {dimension_numbers = #tpu.dot_dimension_numbers<[1], [0], [0], [1], [0, 0, 1, 1], [], []>} : vector<2x32xf32>, vector<32x32xf32>, vector<2x32xf32> -> vector<2x32xf32>
    %81 = arith.addf %79, %80 : vector<2x32xf32>
    %82 = math.tanh %81 : vector<2x32xf32>
    %cst_47 = arith.constant dense<0.000000e+00> : vector<2x32xf32>
    %83 = tpu.matmul %82, %1, %cst_47 {dimension_numbers = #tpu.dot_dimension_numbers<[1], [0], [0], [1], [0, 0, 1, 1], [], []>} : vector<2x32xf32>, vector<32x32xf32>, vector<2x32xf32> -> vector<2x32xf32>
    %cst_48 = arith.constant dense<0.000000e+00> : vector<2x32xf32>
    %84 = tpu.matmul %77, %2, %cst_48 {dimension_numbers = #tpu.dot_dimension_numbers<[1], [0], [0], [1], [0, 0, 1, 1], [], []>} : vector<2x32xf32>, vector<32x32xf32>, vector<2x32xf32> -> vector<2x32xf32>
    %85 = arith.addf %83, %84 : vector<2x32xf32>
    %86 = arith.addf %85, %5 : vector<2x32xf32>
    %87 = math.tanh %86 : vector<2x32xf32>
    %cst_49 = arith.constant dense<0.000000e+00> : vector<2xf32>
    %88 = vector.multi_reduction <add>, %87, %cst_49 [1] : vector<2x32xf32> to vector<2xf32>
    %89 = vector.shape_cast %88 : vector<2xf32> to vector<2x1xf32>
    %cst_50 = arith.constant 3.200000e+01 : f32
    %90 = vector.broadcast %cst_50 : f32 to vector<2x1xf32>
    %91 = arith.divf %89, %90 : vector<2x1xf32>
    %92 = vector.broadcast %91 : vector<2x1xf32> to vector<2x32xf32>
    %93 = arith.subf %87, %92 : vector<2x32xf32>
    %94 = arith.mulf %93, %93 : vector<2x32xf32>
    %cst_51 = arith.constant dense<0.000000e+00> : vector<2xf32>
    %95 = vector.multi_reduction <add>, %94, %cst_51 [1] : vector<2x32xf32> to vector<2xf32>
    %96 = vector.shape_cast %95 : vector<2xf32> to vector<2x1xf32>
    %cst_52 = arith.constant 3.200000e+01 : f32
    %97 = vector.broadcast %cst_52 : f32 to vector<2x1xf32>
    %98 = arith.divf %96, %97 : vector<2x1xf32>
    %99 = vector.broadcast %91 : vector<2x1xf32> to vector<2x32xf32>
    %100 = arith.subf %87, %99 : vector<2x32xf32>
    %cst_53 = arith.constant 9.99999974E-6 : f32
    %101 = vector.broadcast %cst_53 : f32 to vector<2x1xf32>
    %102 = arith.addf %98, %101 : vector<2x1xf32>
    %103 = math.rsqrt %102 : vector<2x1xf32>
    %104 = vector.broadcast %103 : vector<2x1xf32> to vector<2x32xf32>
    %105 = arith.mulf %100, %104 : vector<2x32xf32>
    %c0_54 = arith.constant 0 : index
    %c0_55 = arith.constant 0 : index
    %106 = vector.load %arg6[%c0_54, %c0_55] : memref<1x32xf32, #tpu.memory_space<vmem>>, vector<1x32xf32>
    %107 = vector.broadcast %106 : vector<1x32xf32> to vector<2x32xf32>
    %108 = arith.mulf %105, %107 : vector<2x32xf32>
    %c0_56 = arith.constant 0 : index
    %c0_57 = arith.constant 0 : index
    %109 = vector.load %arg7[%c0_56, %c0_57] : memref<1x32xf32, #tpu.memory_space<vmem>>, vector<1x32xf32>
    %110 = vector.broadcast %109 : vector<1x32xf32> to vector<2x32xf32>
    %111 = arith.addf %108, %110 : vector<2x32xf32>
    %c0_58 = arith.constant 0 : index
    %c0_59 = arith.constant 0 : index
    %112 = vector.load %arg8[%c0_58, %c0_59] : memref<1x32xf32, #tpu.memory_space<vmem>>, vector<1x32xf32>
    %113 = vector.shape_cast %112 : vector<1x32xf32> to vector<1x32xf32>
    %114 = vector.broadcast %113 : vector<1x32xf32> to vector<8x32xf32>
    %cst_60 = arith.constant dense<0.000000e+00> : vector<8x2xf32>
    %115 = tpu.matmul %114, %111, %cst_60 {dimension_numbers = #tpu.dot_dimension_numbers<[1], [1], [0], [0], [0, 0, 1, 0], [], []>} : vector<8x32xf32>, vector<2x32xf32>, vector<8x2xf32> -> vector<8x2xf32>
    %c0_61 = arith.constant 0 : index
    %c0_62 = arith.constant 0 : index
    %116 = vector.load %arg9[%c0_61, %c0_62] : memref<1x1xf32, #tpu.memory_space<vmem>>, vector<1x1xf32>
    %117 = vector.broadcast %116 : vector<1x1xf32> to vector<8x2xf32>
    %118 = arith.addf %115, %117 : vector<8x2xf32>
    %c0_63 = arith.constant 0 : index
    %c0_64 = arith.constant 0 : index
    %119 = vector.load %arg10[%c0_63, %c0_64] : memref<8x2xf32, #tpu.memory_space<vmem>>, vector<8x2xf32>
    tpu.vector_store %arg10[%c0_63, %c0_64], %118 {strides = array<i32>} : memref<8x2xf32, #tpu.memory_space<vmem>>, vector<8x2xf32>,
    return
  }
  func.func @transform_0(%arg0: i32) -> (i32, i32, i32) {
    %c0_i32 = arith.constant 0 : i32
    %c0_i32_0 = arith.constant 0 : i32
    %c0_i32_1 = arith.constant 0 : i32
    return %c0_i32, %arg0, %c0_i32_0 : i32, i32, i32
  }
  func.func @transform_1(%arg0: i32) -> (i32, i32) {
    %c0_i32 = arith.constant 0 : i32
    %c0_i32_0 = arith.constant 0 : i32
    %c0_i32_1 = arith.constant 0 : i32
    return %c0_i32, %c0_i32_0 : i32, i32
  }
  func.func @transform_2(%arg0: i32) -> (i32, i32) {
    %c0_i32 = arith.constant 0 : i32
    %c0_i32_0 = arith.constant 0 : i32
    %c0_i32_1 = arith.constant 0 : i32
    return %c0_i32, %c0_i32_0 : i32, i32
  }
  func.func @transform_3(%arg0: i32) -> (i32, i32) {
    %c0_i32 = arith.constant 0 : i32
    %c0_i32_0 = arith.constant 0 : i32
    %c0_i32_1 = arith.constant 0 : i32
    return %c0_i32, %c0_i32_0 : i32, i32
  }
  func.func @transform_4(%arg0: i32) -> (i32, i32) {
    %c0_i32 = arith.constant 0 : i32
    %c0_i32_0 = arith.constant 0 : i32
    %c0_i32_1 = arith.constant 0 : i32
    return %c0_i32, %c0_i32_0 : i32, i32
  }
  func.func @transform_5(%arg0: i32) -> (i32, i32) {
    %c0_i32 = arith.constant 0 : i32
    %c0_i32_0 = arith.constant 0 : i32
    %c0_i32_1 = arith.constant 0 : i32
    return %c0_i32, %c0_i32_0 : i32, i32
  }
  func.func @transform_6(%arg0: i32) -> (i32, i32) {
    %c0_i32 = arith.constant 0 : i32
    %c0_i32_0 = arith.constant 0 : i32
    %c0_i32_1 = arith.constant 0 : i32
    return %c0_i32, %c0_i32_0 : i32, i32
  }
  func.func @transform_7(%arg0: i32) -> (i32, i32) {
    %c0_i32 = arith.constant 0 : i32
    %c0_i32_0 = arith.constant 0 : i32
    %c0_i32_1 = arith.constant 0 : i32
    return %c0_i32, %c0_i32_0 : i32, i32
  }
  func.func @transform_8(%arg0: i32) -> (i32, i32) {
    %c0_i32 = arith.constant 0 : i32
    %c0_i32_0 = arith.constant 0 : i32
    %c0_i32_1 = arith.constant 0 : i32
    return %c0_i32, %c0_i32_0 : i32, i32
  }
  func.func @transform_9(%arg0: i32) -> (i32, i32) {
    %c0_i32 = arith.constant 0 : i32
    %c0_i32_0 = arith.constant 0 : i32
    return %arg0, %c0_i32 : i32, i32
  }
}

</mosaic_0001>

<llo_original>
// kernel: tpu_custom_call.1
$region0: #{tpu_custom_call.1}
  #allocation0 [shape = 'u32[]', space=smem, size = 0x4, offset = 0x4, fixed_abs, tag = 'smem constant byte address 0x4 - core index']
  #allocation1 [shape = 'u32[144,128]{1,0:T(1,128)}', space=vmem, size = 0x12000, scoped, tag = 'internal scratch']
  #allocation2 [shape = 'f32[1,1]{1,0:T(1,128)S(1)}', space=vmem, size = 0x200, scoped, tag = 'scoped memory for tpu_custom_call.1']
  %s0 = inlined_call_operand.hbm [shape: f32[8,2,32], index: 0, kind: input, shape index: {}]
  %s1 = inlined_call_operand.hbm [shape: f32[32,32], index: 1, kind: input, shape index: {}]
  %s2 = inlined_call_operand.hbm [shape: f32[32,32], index: 2, kind: input, shape index: {}]
  %s3 = inlined_call_operand.hbm [shape: f32[32,32], index: 3, kind: input, shape index: {}]
  %s4 = inlined_call_operand.vmem [shape: f32[1,32], index: 4, kind: input, shape index: {}]
  %s5 = inlined_call_operand.vmem [shape: f32[1,32], index: 5, kind: input, shape index: {}]
  %s6 = inlined_call_operand.vmem [shape: f32[1,32], index: 6, kind: input, shape index: {}]
  %s7 = inlined_call_operand.vmem [shape: f32[1,32], index: 7, kind: input, shape index: {}]
  %s8 = inlined_call_operand.<no memory space> [shape: f32[1,1], index: 8, kind: input, shape index: {}]
  %s9 = inlined_call_operand.vmem [shape: f32[8,2], index: 9, kind: output, shape index: {}]
  %s10 = sld [smem:[#allocation0]]
  $region62: #{tpu_custom_call.1} parent=0
    _
  %s12 = ssub.s32 1, %s10
  %s13 = scalar_select 0, %s12, %s10
  %v14 = vstv %s8
  %15 = vst [vmem:[#allocation2] sm:$0x1] %v14
  $region1: #{tpu_custom_call.1} parent=0
    #allocation3 [shape = 'u8[8192]{0}', space=vmem, size = 0x2000, scoped, tag = 'input window, operand 0, single buffered']
    #allocation4 [shape = 's32[1]{0}', space=sflag, size = 0x4, scoped, tag = 'scoped memory for tpu_custom_call.1']
    #allocation5 [shape = 'u8[16384]{0}', space=vmem, size = 0x4000, scoped, tag = 'input window, operand 1, single buffered']
    #allocation6 [shape = 's32[1]{0}', space=sflag, size = 0x4, scoped, tag = 'scoped memory for tpu_custom_call.1']
    #allocation7 [shape = 'u8[16384]{0}', space=vmem, size = 0x4000, scoped, tag = 'input window, operand 2, single buffered']
    #allocation8 [shape = 'u8[16384]{0}', space=vmem, size = 0x4000, scoped, tag = 'input window, operand 3, single buffered']
    #allocation9 [shape = 's32[1]{0}', space=sflag, size = 0x4, scoped, tag = 'scoped memory for tpu_custom_call.1']
    %16 = vsyncpa [#allocation4], 0
    %17 = vsyncpa [#allocation6], 0
    %18 = vsyncpa [#allocation9], 0
    // Predicated region
    $region2: #{tpu_custom_call.1} parent=1 // pred_check
      _
    $region3: #{tpu_custom_call.1} parent=1 // pred_check_branch
      %20 = sbr.rel (0) target = $region5
    $region4: #{tpu_custom_call.1} parent=1 // pred_region
      %s22 = ssub.s32 256, 256
      %23 = vsyncadd [#allocation4], %s22
      %s24 = sshll.u32 [#allocation3], 4
      %s25 = int_to_ptr.vmem [resolvable:$true] %s24
      %30 = dma.hbm_to_vmem [thread:$0]  %s0, 256, %s25, [#allocation4], 32, 32, 2
    $region5: #{tpu_custom_call.1} parent=1 // pred_fallthru
      _
    // Predicated region
    $region6: #{tpu_custom_call.1} parent=1 // pred_check
      _
    $region7: #{tpu_custom_call.1} parent=1 // pred_check_branch
      %32 = sbr.rel (0) target = $region9
    $region8: #{tpu_custom_call.1} parent=1 // pred_region
      %s34 = ssub.s32 512, 512
      %35 = vsyncadd [#allocation6], %s34
      %s36 = sshll.u32 [#allocation5], 4
      %s37 = int_to_ptr.vmem [resolvable:$true] %s36
      %42 = dma.hbm_to_vmem [thread:$0]  %s1, 512, %s37, [#allocation6], 128, 128, 8
    $region9: #{tpu_custom_call.1} parent=1 // pred_fallthru
      _
    // Predicated region
    $region10: #{tpu_custom_call.1} parent=1 // pred_check
      _
    $region11: #{tpu_custom_call.1} parent=1 // pred_check_branch
      %44 = sbr.rel (0) target = $region13
    $region12: #{tpu_custom_call.1} parent=1 // pred_region
      %s46 = ssub.s32 512, 512
      %47 = vsyncadd [#allocation6], %s46
      %s48 = sshll.u32 [#allocation7], 4
      %s49 = int_to_ptr.vmem [resolvable:$true] %s48
      %54 = dma.hbm_to_vmem [thread:$0]  %s2, 512, %s49, [#allocation6], 128, 128, 8
    $region13: #{tpu_custom_call.1} parent=1 // pred_fallthru
      _
    // Predicated region
    $region14: #{tpu_custom_call.1} parent=1 // pred_check
      _
    $region15: #{tpu_custom_call.1} parent=1 // pred_check_branch
      %56 = sbr.rel (0) target = $region17
    $region16: #{tpu_custom_call.1} parent=1 // pred_region
      %s58 = ssub.s32 512, 512
      %59 = vsyncadd [#allocation9], %s58
      %s60 = sshll.u32 [#allocation8], 4
      %s61 = int_to_ptr.vmem [resolvable:$true] %s60
      %66 = dma.hbm_to_vmem [thread:$0]  %s3, 512, %s61, [#allocation9], 128, 128, 8
    $region17: #{tpu_custom_call.1} parent=1 // pred_fallthru
      _
    // Predicated region
    $region18: #{tpu_custom_call.1} parent=1 // pred_check
      _
    $region19: #{tpu_custom_call.1} parent=1 // pred_check_branch
      %68 = sbr.rel (0) target = $region21
    $region20: #{tpu_custom_call.1} parent=1 // pred_region
      _
    $region21: #{tpu_custom_call.1} parent=1 // pred_fallthru
      _
    // Predicated region
    $region22: #{tpu_custom_call.1} parent=1 // pred_check
      _
    $region23: #{tpu_custom_call.1} parent=1 // pred_check_branch
      %70 = sbr.rel (0) target = $region25
    $region24: #{tpu_custom_call.1} parent=1 // pred_region
      _
    $region25: #{tpu_custom_call.1} parent=1 // pred_fallthru
      _
    // Predicated region
    $region26: #{tpu_custom_call.1} parent=1 // pred_check
      _
    $region27: #{tpu_custom_call.1} parent=1 // pred_check_branch
      %72 = sbr.rel (0) target = $region29
    $region28: #{tpu_custom_call.1} parent=1 // pred_region
      _
    $region29: #{tpu_custom_call.1} parent=1 // pred_fallthru
      _
    // Predicated region
    $region30: #{tpu_custom_call.1} parent=1 // pred_check
      _
    $region31: #{tpu_custom_call.1} parent=1 // pred_check_branch
      %74 = sbr.rel (0) target = $region33
    $region32: #{tpu_custom_call.1} parent=1 // pred_region
      _
    $region33: #{tpu_custom_call.1} parent=1 // pred_fallthru
      _
    // Predicated region
    $region34: #{tpu_custom_call.1} parent=1 // pred_check
      _
    $region35: #{tpu_custom_call.1} parent=1 // pred_check_branch
      %76 = sbr.rel (0) target = $region37
    $region36: #{tpu_custom_call.1} parent=1 // pred_region
      _
    $region37: #{tpu_custom_call.1} parent=1 // pred_fallthru
      _
    // Predicated region
    $region38: #{tpu_custom_call.1} parent=1 // pred_check
      _
    $region39: #{tpu_custom_call.1} parent=1 // pred_check_branch
      %78 = sbr.rel (0) target = $region41
    $region40: #{tpu_custom_call.1} parent=1 // pred_region
      %79 = dma.done [#allocation4], 256
    $region41: #{tpu_custom_call.1} parent=1 // pred_fallthru
      _
    // Predicated region
    $region42: #{tpu_custom_call.1} parent=1 // pred_check
      _
    $region43: #{tpu_custom_call.1} parent=1 // pred_check_branch
      %81 = sbr.rel (0) target = $region45
    $region44: #{tpu_custom_call.1} parent=1 // pred_region
      %82 = dma.done [#allocation6], 512
    $region45: #{tpu_custom_call.1} parent=1 // pred_fallthru
      _
    // Predicated region
    $region46: #{tpu_custom_call.1} parent=1 // pred_check
      _
    $region47: #{tpu_custom_call.1} parent=1 // pred_check_branch
      %84 = sbr.rel (0) target = $region49
    $region48: #{tpu_custom_call.1} parent=1 // pred_region
      %85 = dma.done [#allocation6], 512
    $region49: #{tpu_custom_call.1} parent=1 // pred_fallthru
      _
    // Predicated region
    $region50: #{tpu_custom_call.1} parent=1 // pred_check
      _
    $region51: #{tpu_custom_call.1} parent=1 // pred_check_branch
      %87 = sbr.rel (0) target = $region53
    $region52: #{tpu_custom_call.1} parent=1 // pred_region
      %88 = dma.done [#allocation9], 512
    $region53: #{tpu_custom_call.1} parent=1 // pred_fallthru
      _
    %v89 = vld [vmem:[#allocation5] sm:$0xff]
    %v90 = vld [vmem:[#allocation5 + $0x8] sm:$0xff]
    %v91 = vld [vmem:[#allocation5 + $0x10] sm:$0xff]
    %v92 = vld [vmem:[#allocation5 + $0x18] sm:$0xff]
    %v93 = vld [vmem:[#allocation7] sm:$0xff]
    %v94 = vld [vmem:[#allocation7 + $0x8] sm:$0xff]
    %v95 = vld [vmem:[#allocation7 + $0x10] sm:$0xff]
    %v96 = vld [vmem:[#allocation7 + $0x18] sm:$0xff]
    %v97 = vld [vmem:[#allocation8] sm:$0xff]
    %v98 = vld [vmem:[#allocation8 + $0x8] sm:$0xff]
    %v99 = vld [vmem:[#allocation8 + $0x10] sm:$0xff]
    %v100 = vld [vmem:[#allocation8 + $0x18] sm:$0xff]
    %v101 = vld [vmem:[%s4] sm:$0x1]
    %v103 = vlaneseq
    %v104 = vshrl.u32 %v103, 7
    %v105 = vsub.s32 0, %v104
    %v106 = vrot.slane %v101, %v105
    %v108 = vld [vmem:[#allocation3] sm:$0x3]
    %vm109 = vcmask 261120
    %v111 = vsel %vm109, 0.0, 0
    %113 = vmatprep.subr.mxu0 0.0
    %114 = vmatpush1.msra.mxu0 %v89
    %115 = vmatprep.subr.mxu0 0.0
    %116 = vmatpush1.msra.mxu0 %v90
    %117 = vmatprep.subr.mxu0 0.0
    %118 = vmatpush1.msra.mxu0 %v91
    %119 = vmatprep.subr.mxu0 0.0
    %120 = vmatpush1.msra.mxu0 %v92
    %121 = vmatprep.subr.mxu0 0.0
    %122 = vmatpush1.msra.mxu0 0.0
    %123 = vmatprep.subr.mxu0 0.0
    %124 = vmatpush1.msra.mxu0 0.0
    %125 = vmatprep.subr.mxu0 0.0
    %126 = vmatpush1.msra.mxu0 0.0
    %127 = vmatprep.subr.mxu0 0.0
    %128 = vmatpush1.msra.mxu0 0.0
    %129 = vmatprep.subr.mxu0 0.0
    %130 = vmatpush1.msra.mxu0 0.0
    %131 = vmatprep.subr.mxu0 0.0
    %132 = vmatpush1.msra.mxu0 0.0
    %133 = vmatprep.subr.mxu0 0.0
    %134 = vmatpush1.msra.mxu0 0.0
    %135 = vmatprep.subr.mxu0 0.0
    %136 = vmatpush1.msra.mxu0 0.0
    %137 = vmatprep.subr.mxu0 0.0
    %138 = vmatpush1.msra.mxu0 0.0
    %139 = vmatprep.subr.mxu0 0.0
    %140 = vmatpush1.msra.mxu0 0.0
    %141 = vmatprep.subr.mxu0 0.0
    %142 = vmatpush1.msra.mxu0 0.0
    %143 = vmatprep.subr.mxu0 0.0
    %144 = vmatpush1.msra.mxu0 0.0
    %145 = vmatprep.subr.mxu0 0.0
    %146 = vmatpush1.msra.mxu0 0.0
    %147 = vmatprep.subr.mxu0 0.0
    %148 = vmatpush1.msra.mxu0 0.0
    %149 = vmatprep.subr.mxu0 0.0
    %150 = vmatpush1.msra.mxu0 0.0
    %151 = vmatprep.subr.mxu0 0.0
    %152 = vmatpush1.msra.mxu0 0.0
    %153 = vmatprep.subr.mxu0 0.0
    %154 = vmatpush1.msra.mxu0 0.0
    %155 = vmatprep.subr.mxu0 0.0
    %156 = vmatpush1.msra.mxu0 0.0
    %157 = vmatprep.subr.mxu0 0.0
    %158 = vmatpush1.msra.mxu0 0.0
    %159 = vmatprep.subr.mxu0 0.0
    %160 = vmatpush1.msra.mxu0 0.0
    %161 = vmatprep.subr.mxu0 0.0
    %162 = vmatpush1.msra.mxu0 0.0
    %163 = vmatprep.subr.mxu0 0.0
    %164 = vmatpush1.msra.mxu0 0.0
    %165 = vmatprep.subr.mxu0 0.0
    %166 = vmatpush1.msra.mxu0 0.0
    %167 = vmatprep.subr.mxu0 0.0
    %168 = vmatpush1.msra.mxu0 0.0
    %169 = vmatprep.subr.mxu0 0.0
    %170 = vmatpush1.msra.mxu0 0.0
    %171 = vmatprep.subr.mxu0 0.0
    %172 = vmatpush1.msra.mxu0 0.0
    %173 = vmatprep.subr.mxu0 0.0
    %174 = vmatpush1.msra.mxu0 0.0
    %175 = vmatprep.subr.mxu0 0.0
    %176 = vmatpush1.msra.mxu0 0.0
    %177 = vmatprep.mubr.f32.mxu0 0.0
    %178 = vmatmul.mubr.f32.gmra.mrb[0].mxu0 %v111
    %v179 = vpop.f32.mrb[0].mxu0
    %v180 = vadd.f32 0.0, %v179
    %v181 = vpop.f32.mrb[0].mxu0
    %182 = vdwg.mxu0
    %v183 = vadd.f32 %v108, %v180
    %v184 = vtanh.pop %v183
    %185 = vmatprep.subr.mxu0 0.0
    %186 = vmatpush1.msra.mxu0 %v97
    %187 = vmatprep.subr.mxu0 0.0
    %188 = vmatpush1.msra.mxu0 %v98
    %189 = vmatprep.subr.mxu0 0.0
    %190 = vmatpush1.msra.mxu0 %v99
    %191 = vmatprep.subr.mxu0 0.0
    %192 = vmatpush1.msra.mxu0 %v100
    %193 = vmatprep.subr.mxu0 0.0
    %194 = vmatpush1.msra.mxu0 0.0
    %195 = vmatprep.subr.mxu0 0.0
    %196 = vmatpush1.msra.mxu0 0.0
    %197 = vmatprep.subr.mxu0 0.0
    %198 = vmatpush1.msra.mxu0 0.0
    %199 = vmatprep.subr.mxu0 0.0
    %200 = vmatpush1.msra.mxu0 0.0
    %201 = vmatprep.subr.mxu0 0.0
    %202 = vmatpush1.msra.mxu0 0.0
    %203 = vmatprep.subr.mxu0 0.0
    %204 = vmatpush1.msra.mxu0 0.0
    %205 = vmatprep.subr.mxu0 0.0
    %206 = vmatpush1.msra.mxu0 0.0
    %207 = vmatprep.subr.mxu0 0.0
    %208 = vmatpush1.msra.mxu0 0.0
    %209 = vmatprep.subr.mxu0 0.0
    %210 = vmatpush1.msra.mxu0 0.0
    %211 = vmatprep.subr.mxu0 0.0
    %212 = vmatpush1.msra.mxu0 0.0
    %213 = vmatprep.subr.mxu0 0.0
    %214 = vmatpush1.msra.mxu0 0.0
    %215 = vmatprep.subr.mxu0 0.0
    %216 = vmatpush1.msra.mxu0 0.0
    %217 = vmatprep.subr.mxu0 0.0
    %218 = vmatpush1.msra.mxu0 0.0
    %219 = vmatprep.subr.mxu0 0.0
    %220 = vmatpush1.msra.mxu0 0.0
    %221 = vmatprep.subr.mxu0 0.0
    %222 = vmatpush1.msra.mxu0 0.0
    %223 = vmatprep.subr.mxu0 0.0
    %224 = vmatpush1.msra.mxu0 0.0
    %225 = vmatprep.subr.mxu0 0.0
    %226 = vmatpush1.msra.mxu0 0.0
    %227 = vmatprep.subr.mxu0 0.0
    %228 = vmatpush1.msra.mxu0 0.0
    %229 = vmatprep.subr.mxu0 0.0
    %230 = vmatpush1.msra.mxu0 0.0
    %231 = vmatprep.subr.mxu0 0.0
    %232 = vmatpush1.msra.mxu0 0.0
    %233 = vmatprep.subr.mxu0 0.0
    %234 = vmatpush1.msra.mxu0 0.0
    %235 = vmatprep.subr.mxu0 0.0
    %236 = vmatpush1.msra.mxu0 0.0
    %237 = vmatprep.subr.mxu0 0.0
    %238 = vmatpush1.msra.mxu0 0.0
    %239 = vmatprep.subr.mxu0 0.0
    %240 = vmatpush1.msra.mxu0 0.0
    %241 = vmatprep.subr.mxu0 0.0
    %242 = vmatpush1.msra.mxu0 0.0
    %243 = vmatprep.subr.mxu0 0.0
    %244 = vmatpush1.msra.mxu0 0.0
    %245 = vmatprep.subr.mxu0 0.0
    %246 = vmatpush1.msra.mxu0 0.0
    %247 = vmatprep.subr.mxu0 0.0
    %248 = vmatpush1.msra.mxu0 0.0
    %249 = vmatprep.mubr.f32.mxu0 0.0
    %250 = vmatmul.mubr.f32.gmra.mrb[0].mxu0 %v111
    %v251 = vpop.f32.mrb[0].mxu0
    %v252 = vadd.f32 0.0, %v251
    %v253 = vpop.f32.mrb[0].mxu0
    %254 = vdwg.mxu0
    %v256 = vsel %vm109, %v184, 0
    %258 = vmatprep.subr.mxu0 0.0
    %259 = vmatpush1.msra.mxu0 %v93
    %260 = vmatprep.subr.mxu0 0.0
    %261 = vmatpush1.msra.mxu0 %v94
    %262 = vmatprep.subr.mxu0 0.0
    %263 = vmatpush1.msra.mxu0 %v95
    %264 = vmatprep.subr.mxu0 0.0
    %265 = vmatpush1.msra.mxu0 %v96
    %266 = vmatprep.subr.mxu0 0.0
    %267 = vmatpush1.msra.mxu0 0.0
    %268 = vmatprep.subr.mxu0 0.0
    %269 = vmatpush1.msra.mxu0 0.0
    %270 = vmatprep.subr.mxu0 0.0
    %271 = vmatpush1.msra.mxu0 0.0
    %272 = vmatprep.subr.mxu0 0.0
    %273 = vmatpush1.msra.mxu0 0.0
    %274 = vmatprep.subr.mxu0 0.0
    %275 = vmatpush1.msra.mxu0 0.0
    %276 = vmatprep.subr.mxu0 0.0
    %277 = vmatpush1.msra.mxu0 0.0
    %278 = vmatprep.subr.mxu0 0.0
    %279 = vmatpush1.msra.mxu0 0.0
    %280 = vmatprep.subr.mxu0 0.0
    %281 = vmatpush1.msra.mxu0 0.0
    %282 = vmatprep.subr.mxu0 0.0
    %283 = vmatpush1.msra.mxu0 0.0
    %284 = vmatprep.subr.mxu0 0.0
    %285 = vmatpush1.msra.mxu0 0.0
    %286 = vmatprep.subr.mxu0 0.0
    %287 = vmatpush1.msra.mxu0 0.0
    %288 = vmatprep.subr.mxu0 0.0
    %289 = vmatpush1.msra.mxu0 0.0
    %290 = vmatprep.subr.mxu0 0.0
    %291 = vmatpush1.msra.mxu0 0.0
    %292 = vmatprep.subr.mxu0 0.0
    %293 = vmatpush1.msra.mxu0 0.0
    %294 = vmatprep.subr.mxu0 0.0
    %295 = vmatpush1.msra.mxu0 0.0
    %296 = vmatprep.subr.mxu0 0.0
    %297 = vmatpush1.msra.mxu0 0.0
    %298 = vmatprep.subr.mxu0 0.0
    %299 = vmatpush1.msra.mxu0 0.0
    %300 = vmatprep.subr.mxu0 0.0
    %301 = vmatpush1.msra.mxu0 0.0
    %302 = vmatprep.subr.mxu0 0.0
    %303 = vmatpush1.msra.mxu0 0.0
    %304 = vmatprep.subr.mxu0 0.0
    %305 = vmatpush1.msra.mxu0 0.0
    %306 = vmatprep.subr.mxu0 0.0
    %307 = vmatpush1.msra.mxu0 0.0
    %308 = vmatprep.subr.mxu0 0.0
    %309 = vmatpush1.msra.mxu0 0.0
    %310 = vmatprep.subr.mxu0 0.0
    %311 = vmatpush1.msra.mxu0 0.0
    %312 = vmatprep.subr.mxu0 0.0
    %313 = vmatpush1.msra.mxu0 0.0
    %314 = vmatprep.subr.mxu0 0.0
    %315 = vmatpush1.msra.mxu0 0.0
    %316 = vmatprep.subr.mxu0 0.0
    %317 = vmatpush1.msra.mxu0 0.0
    %318 = vmatprep.subr.mxu0 0.0
    %319 = vmatpush1.msra.mxu0 0.0
    %320 = vmatprep.subr.mxu0 0.0
    %321 = vmatpush1.msra.mxu0 0.0
    %322 = vmatprep.mubr.f32.mxu0 0.0
    %323 = vmatmul.mubr.f32.gmra.mrb[0].mxu0 %v256
    %v324 = vpop.f32.mrb[0].mxu0
    %v325 = vadd.f32 %v252, %v324
    %v326 = vpop.f32.mrb[0].mxu0
    %327 = vdwg.mxu0
    %v328 = vadd.f32 %v325, %v106
    %v329 = vtanh.pop %v328
    %s330 = scalar_lea.vmem [#allocation3], 2
    %v331 = vld [vmem:[%s330] sm:$0x3]
    %332 = vmatprep.subr.mxu0 0.0
    %333 = vmatpush1.msra.mxu0 %v89
    %334 = vmatprep.subr.mxu0 0.0
    %335 = vmatpush1.msra.mxu0 %v90
    %336 = vmatprep.subr.mxu0 0.0
    %337 = vmatpush1.msra.mxu0 %v91
    %338 = vmatprep.subr.mxu0 0.0
    %339 = vmatpush1.msra.mxu0 %v92
    %340 = vmatprep.subr.mxu0 0.0
    %341 = vmatpush1.msra.mxu0 0.0
    %342 = vmatprep.subr.mxu0 0.0
    %343 = vmatpush1.msra.mxu0 0.0
    %344 = vmatprep.subr.mxu0 0.0
    %345 = vmatpush1.msra.mxu0 0.0
    %346 = vmatprep.subr.mxu0 0.0
    %347 = vmatpush1.msra.mxu0 0.0
    %348 = vmatprep.subr.mxu0 0.0
    %349 = vmatpush1.msra.mxu0 0.0
    %350 = vmatprep.subr.mxu0 0.0
    %351 = vmatpush1.msra.mxu0 0.0
    %352 = vmatprep.subr.mxu0 0.0
    %353 = vmatpush1.msra.mxu0 0.0
    %354 = vmatprep.subr.mxu0 0.0
    %355 = vmatpush1.msra.mxu0 0.0
    %356 = vmatprep.subr.mxu0 0.0
    %357 = vmatpush1.msra.mxu0 0.0
    %358 = vmatprep.subr.mxu0 0.0
    %359 = vmatpush1.msra.mxu0 0.0
    %360 = vmatprep.subr.mxu0 0.0
    %361 = vmatpush1.msra.mxu0 0.0
    %362 = vmatprep.subr.mxu0 0.0
    %363 = vmatpush1.msra.mxu0 0.0
    %364 = vmatprep.subr.mxu0 0.0
    %365 = vmatpush1.msra.mxu0 0.0
    %366 = vmatprep.subr.mxu0 0.0
    %367 = vmatpush1.msra.mxu0 0.0
    %368 = vmatprep.subr.mxu0 0.0
    %369 = vmatpush1.msra.mxu0 0.0
    %370 = vmatprep.subr.mxu0 0.0
    %371 = vmatpush1.msra.mxu0 0.0
    %372 = vmatprep.subr.mxu0 0.0
    %373 = vmatpush1.msra.mxu0 0.0
    %374 = vmatprep.subr.mxu0 0.0
    %375 = vmatpush1.msra.mxu0 0.0
    %376 = vmatprep.subr.mxu0 0.0
    %377 = vmatpush1.msra.mxu0 0.0
    %378 = vmatprep.subr.mxu0 0.0
    %379 = vmatpush1.msra.mxu0 0.0
    %380 = vmatprep.subr.mxu0 0.0
    %381 = vmatpush1.msra.mxu0 0.0
    %382 = vmatprep.subr.mxu0 0.0
    %383 = vmatpush1.msra.mxu0 0.0
    %384 = vmatprep.subr.mxu0 0.0
    %385 = vmatpush1.msra.mxu0 0.0
    %386 = vmatprep.subr.mxu0 0.0
    %387 = vmatpush1.msra.mxu0 0.0
    %388 = vmatprep.subr.mxu0 0.0
    %389 = vmatpush1.msra.mxu0 0.0
    %390 = vmatprep.subr.mxu0 0.0
    %391 = vmatpush1.msra.mxu0 0.0
    %392 = vmatprep.subr.mxu0 0.0
    %393 = vmatpush1.msra.mxu0 0.0
    %394 = vmatprep.subr.mxu0 0.0
    %395 = vmatpush1.msra.mxu0 0.0
    %396 = vmatprep.mubr.f32.mxu0 0.0
    %397 = vmatmul.mubr.f32.gmra.mrb[0].mxu0 %v256
    %v398 = vpop.f32.mrb[0].mxu0
    %v399 = vadd.f32 0.0, %v398
    %v400 = vpop.f32.mrb[0].mxu0
    %401 = vdwg.mxu0
    %v402 = vadd.f32 %v331, %v399
    %v403 = vtanh.pop %v402
    %v405 = vsel %vm109, %v329, 0
    %407 = vmatprep.subr.mxu0 0.0
    %408 = vmatpush1.msra.mxu0 %v97
    %409 = vmatprep.subr.mxu0 0.0
    %410 = vmatpush1.msra.mxu0 %v98
    %411 = vmatprep.subr.mxu0 0.0
    %412 = vmatpush1.msra.mxu0 %v99
    %413 = vmatprep.subr.mxu0 0.0
    %414 = vmatpush1.msra.mxu0 %v100
    %415 = vmatprep.subr.mxu0 0.0
    %416 = vmatpush1.msra.mxu0 0.0
    %417 = vmatprep.subr.mxu0 0.0
    %418 = vmatpush1.msra.mxu0 0.0
    %419 = vmatprep.subr.mxu0 0.0
    %420 = vmatpush1.msra.mxu0 0.0
    %421 = vmatprep.subr.mxu0 0.0
    %422 = vmatpush1.msra.mxu0 0.0
    %423 = vmatprep.subr.mxu0 0.0
    %424 = vmatpush1.msra.mxu0 0.0
    %425 = vmatprep.subr.mxu0 0.0
    %426 = vmatpush1.msra.mxu0 0.0
    %427 = vmatprep.subr.mxu0 0.0
    %428 = vmatpush1.msra.mxu0 0.0
    %429 = vmatprep.subr.mxu0 0.0
    %430 = vmatpush1.msra.mxu0 0.0
    %431 = vmatprep.subr.mxu0 0.0
    %432 = vmatpush1.msra.mxu0 0.0
    %433 = vmatprep.subr.mxu0 0.0
    %434 = vmatpush1.msra.mxu0 0.0
    %435 = vmatprep.subr.mxu0 0.0
    %436 = vmatpush1.msra.mxu0 0.0
    %437 = vmatprep.subr.mxu0 0.0
    %438 = vmatpush1.msra.mxu0 0.0
    %439 = vmatprep.subr.mxu0 0.0
    %440 = vmatpush1.msra.mxu0 0.0
    %441 = vmatprep.subr.mxu0 0.0
    %442 = vmatpush1.msra.mxu0 0.0
    %443 = vmatprep.subr.mxu0 0.0
    %444 = vmatpush1.msra.mxu0 0.0
    %445 = vmatprep.subr.mxu0 0.0
    %446 = vmatpush1.msra.mxu0 0.0
    %447 = vmatprep.subr.mxu0 0.0
    %448 = vmatpush1.msra.mxu0 0.0
    %449 = vmatprep.subr.mxu0 0.0
    %450 = vmatpush1.msra.mxu0 0.0
    %451 = vmatprep.subr.mxu0 0.0
    %452 = vmatpush1.msra.mxu0 0.0
    %453 = vmatprep.subr.mxu0 0.0
    %454 = vmatpush1.msra.mxu0 0.0
    %455 = vmatprep.subr.mxu0 0.0
    %456 = vmatpush1.msra.mxu0 0.0
    %457 = vmatprep.subr.mxu0 0.0
    %458 = vmatpush1.msra.mxu0 0.0
    %459 = vmatprep.subr.mxu0 0.0
    %460 = vmatpush1.msra.mxu0 0.0
    %461 = vmatprep.subr.mxu0 0.0
    %462 = vmatpush1.msra.mxu0 0.0
    %463 = vmatprep.subr.mxu0 0.0
    %464 = vmatpush1.msra.mxu0 0.0
    %465 = vmatprep.subr.mxu0 0.0
    %466 = vmatpush1.msra.mxu0 0.0
    %467 = vmatprep.subr.mxu0 0.0
    %468 = vmatpush1.msra.mxu0 0.0
    %469 = vmatprep.subr.mxu0 0.0
    %470 = vmatpush1.msra.mxu0 0.0
    %471 = vmatprep.mubr.f32.mxu0 0.0
    %472 = vmatmul.mubr.f32.gmra.mrb[0].mxu0 %v405
    %v473 = vpop.f32.mrb[0].mxu0
    %v474 = vadd.f32 0.0, %v473
    %v475 = vpop.f32.mrb[0].mxu0
    %476 = vdwg.mxu0
    %v478 = vsel %vm109, %v403, 0
    %480 = vmatprep.subr.mxu0 0.0
    %481 = vmatpush1.msra.mxu0 %v93
    %482 = vmatprep.subr.mxu0 0.0
    %483 = vmatpush1.msra.mxu0 %v94
    %484 = vmatprep.subr.mxu0 0.0
    %485 = vmatpush1.msra.mxu0 %v95
    %486 = vmatprep.subr.mxu0 0.0
    %487 = vmatpush1.msra.mxu0 %v96
    %488 = vmatprep.subr.mxu0 0.0
    %489 = vmatpush1.msra.mxu0 0.0
    %490 = vmatprep.subr.mxu0 0.0
    %491 = vmatpush1.msra.mxu0 0.0
    %492 = vmatprep.subr.mxu0 0.0
    %493 = vmatpush1.msra.mxu0 0.0
    %494 = vmatprep.subr.mxu0 0.0
    %495 = vmatpush1.msra.mxu0 0.0
    %496 = vmatprep.subr.mxu0 0.0
    %497 = vmatpush1.msra.mxu0 0.0
    %498 = vmatprep.subr.mxu0 0.0
    %499 = vmatpush1.msra.mxu0 0.0
    %500 = vmatprep.subr.mxu0 0.0
    %501 = vmatpush1.msra.mxu0 0.0
    %502 = vmatprep.subr.mxu0 0.0
    %503 = vmatpush1.msra.mxu0 0.0
    %504 = vmatprep.subr.mxu0 0.0
    %505 = vmatpush1.msra.mxu0 0.0
    %506 = vmatprep.subr.mxu0 0.0
    %507 = vmatpush1.msra.mxu0 0.0
    %508 = vmatprep.subr.mxu0 0.0
    %509 = vmatpush1.msra.mxu0 0.0
    %510 = vmatprep.subr.mxu0 0.0
    %511 = vmatpush1.msra.mxu0 0.0
    %512 = vmatprep.subr.mxu0 0.0
    %513 = vmatpush1.msra.mxu0 0.0
    %514 = vmatprep.subr.mxu0 0.0
    %515 = vmatpush1.msra.mxu0 0.0
    %516 = vmatprep.subr.mxu0 0.0
    %517 = vmatpush1.msra.mxu0 0.0
    %518 = vmatprep.subr.mxu0 0.0
    %519 = vmatpush1.msra.mxu0 0.0
    %520 = vmatprep.subr.mxu0 0.0
    %521 = vmatpush1.msra.mxu0 0.0
    %522 = vmatprep.subr.mxu0 0.0
    %523 = vmatpush1.msra.mxu0 0.0
    %524 = vmatprep.subr.mxu0 0.0
    %525 = vmatpush1.msra.mxu0 0.0
    %526 = vmatprep.subr.mxu0 0.0
    %527 = vmatpush1.msra.mxu0 0.0
    %528 = vmatprep.subr.mxu0 0.0
    %529 = vmatpush1.msra.mxu0 0.0
    %530 = vmatprep.subr.mxu0 0.0
    %531 = vmatpush1.msra.mxu0 0.0
    %532 = vmatprep.subr.mxu0 0.0
    %533 = vmatpush1.msra.mxu0 0.0
    %534 = vmatprep.subr.mxu0 0.0
    %535 = vmatpush1.msra.mxu0 0.0
    %536 = vmatprep.subr.mxu0 0.0
    %537 = vmatpush1.msra.mxu0 0.0
    %538 = vmatprep.subr.mxu0 0.0
    %539 = vmatpush1.msra.mxu0 0.0
    %540 = vmatprep.subr.mxu0 0.0
    %541 = vmatpush1.msra.mxu0 0.0
    %542 = vmatprep.subr.mxu0 0.0
    %543 = vmatpush1.msra.mxu0 0.0
    %544 = vmatprep.mubr.f32.mxu0 0.0
    %545 = vmatmul.mubr.f32.gmra.mrb[0].mxu0 %v478
    %v546 = vpop.f32.mrb[0].mxu0
    %v547 = vadd.f32 %v474, %v546
    %v548 = vpop.f32.mrb[0].mxu0
    %549 = vdwg.mxu0
    %v550 = vadd.f32 %v547, %v106
    %v551 = vtanh.pop %v550
    %s552 = scalar_lea.vmem [#allocation3], 4
    %v553 = vld [vmem:[%s552] sm:$0x3]
    %554 = vmatprep.subr.mxu0 0.0
    %555 = vmatpush1.msra.mxu0 %v89
    %556 = vmatprep.subr.mxu0 0.0
    %557 = vmatpush1.msra.mxu0 %v90
    %558 = vmatprep.subr.mxu0 0.0
    %559 = vmatpush1.msra.mxu0 %v91
    %560 = vmatprep.subr.mxu0 0.0
    %561 = vmatpush1.msra.mxu0 %v92
    %562 = vmatprep.subr.mxu0 0.0
    %563 = vmatpush1.msra.mxu0 0.0
    %564 = vmatprep.subr.mxu0 0.0
    %565 = vmatpush1.msra.mxu0 0.0
    %566 = vmatprep.subr.mxu0 0.0
    %567 = vmatpush1.msra.mxu0 0.0
    %568 = vmatprep.subr.mxu0 0.0
    %569 = vmatpush1.msra.mxu0 0.0
    %570 = vmatprep.subr.mxu0 0.0
    %571 = vmatpush1.msra.mxu0 0.0
    %572 = vmatprep.subr.mxu0 0.0
    %573 = vmatpush1.msra.mxu0 0.0
    %574 = vmatprep.subr.mxu0 0.0
    %575 = vmatpush1.msra.mxu0 0.0
    %576 = vmatprep.subr.mxu0 0.0
    %577 = vmatpush1.msra.mxu0 0.0
    %578 = vmatprep.subr.mxu0 0.0
    %579 = vmatpush1.msra.mxu0 0.0
    %580 = vmatprep.subr.mxu0 0.0
    %581 = vmatpush1.msra.mxu0 0.0
    %582 = vmatprep.subr.mxu0 0.0
    %583 = vmatpush1.msra.mxu0 0.0
    %584 = vmatprep.subr.mxu0 0.0
    %585 = vmatpush1.msra.mxu0 0.0
    %586 = vmatprep.subr.mxu0 0.0
    %587 = vmatpush1.msra.mxu0 0.0
    %588 = vmatprep.subr.mxu0 0.0
    %589 = vmatpush1.msra.mxu0 0.0
    %590 = vmatprep.subr.mxu0 0.0
    %591 = vmatpush1.msra.mxu0 0.0
    %592 = vmatprep.subr.mxu0 0.0
    %593 = vmatpush1.msra.mxu0 0.0
    %594 = vmatprep.subr.mxu0 0.0
    %595 = vmatpush1.msra.mxu0 0.0
    %596 = vmatprep.subr.mxu0 0.0
    %597 = vmatpush1.msra.mxu0 0.0
    %598 = vmatprep.subr.mxu0 0.0
    %599 = vmatpush1.msra.mxu0 0.0
    %600 = vmatprep.subr.mxu0 0.0
    %601 = vmatpush1.msra.mxu0 0.0
    %602 = vmatprep.subr.mxu0 0.0
    %603 = vmatpush1.msra.mxu0 0.0
    %604 = vmatprep.subr.mxu0 0.0
    %605 = vmatpush1.msra.mxu0 0.0
    %606 = vmatprep.subr.mxu0 0.0
    %607 = vmatpush1.msra.mxu0 0.0
    %608 = vmatprep.subr.mxu0 0.0
    %609 = vmatpush1.msra.mxu0 0.0
    %610 = vmatprep.subr.mxu0 0.0
    %611 = vmatpush1.msra.mxu0 0.0
    %612 = vmatprep.subr.mxu0 0.0
    %613 = vmatpush1.msra.mxu0 0.0
    %614 = vmatprep.subr.mxu0 0.0
    %615 = vmatpush1.msra.mxu0 0.0
    %616 = vmatprep.subr.mxu0 0.0
    %617 = vmatpush1.msra.mxu0 0.0
    %618 = vmatprep.mubr.f32.mxu0 0.0
    %619 = vmatmul.mubr.f32.gmra.mrb[0].mxu0 %v478
    %v620 = vpop.f32.mrb[0].mxu0
    %v621 = vadd.f32 0.0, %v620
    %v622 = vpop.f32.mrb[0].mxu0
    %623 = vdwg.mxu0
    %v624 = vadd.f32 %v553, %v621
    %v625 = vtanh.pop %v624
    %v627 = vsel %vm109, %v551, 0
    %629 = vmatprep.subr.mxu0 0.0
    %630 = vmatpush1.msra.mxu0 %v97
    %631 = vmatprep.subr.mxu0 0.0
    %632 = vmatpush1.msra.mxu0 %v98
    %633 = vmatprep.subr.mxu0 0.0
    %634 = vmatpush1.msra.mxu0 %v99
    %635 = vmatprep.subr.mxu0 0.0
    %636 = vmatpush1.msra.mxu0 %v100
    %637 = vmatprep.subr.mxu0 0.0
    %638 = vmatpush1.msra.mxu0 0.0
    %639 = vmatprep.subr.mxu0 0.0
    %640 = vmatpush1.msra.mxu0 0.0
    %641 = vmatprep.subr.mxu0 0.0
    %642 = vmatpush1.msra.mxu0 0.0
    %643 = vmatprep.subr.mxu0 0.0
    %644 = vmatpush1.msra.mxu0 0.0
    %645 = vmatprep.subr.mxu0 0.0
    %646 = vmatpush1.msra.mxu0 0.0
    %647 = vmatprep.subr.mxu0 0.0
    %648 = vmatpush1.msra.mxu0 0.0
    %649 = vmatprep.subr.mxu0 0.0
    %650 = vmatpush1.msra.mxu0 0.0
    %651 = vmatprep.subr.mxu0 0.0
    %652 = vmatpush1.msra.mxu0 0.0
    %653 = vmatprep.subr.mxu0 0.0
    %654 = vmatpush1.msra.mxu0 0.0
    %655 = vmatprep.subr.mxu0 0.0
    %656 = vmatpush1.msra.mxu0 0.0
    %657 = vmatprep.subr.mxu0 0.0
    %658 = vmatpush1.msra.mxu0 0.0
    %659 = vmatprep.subr.mxu0 0.0
    %660 = vmatpush1.msra.mxu0 0.0
    %661 = vmatprep.subr.mxu0 0.0
    %662 = vmatpush1.msra.mxu0 0.0
    %663 = vmatprep.subr.mxu0 0.0
    %664 = vmatpush1.msra.mxu0 0.0
    %665 = vmatprep.subr.mxu0 0.0
    %666 = vmatpush1.msra.mxu0 0.0
    %667 = vmatprep.subr.mxu0 0.0
    %668 = vmatpush1.msra.mxu0 0.0
    %669 = vmatprep.subr.mxu0 0.0
    %670 = vmatpush1.msra.mxu0 0.0
    %671 = vmatprep.subr.mxu0 0.0
    %672 = vmatpush1.msra.mxu0 0.0
    %673 = vmatprep.subr.mxu0 0.0
    %674 = vmatpush1.msra.mxu0 0.0
    %675 = vmatprep.subr.mxu0 0.0
    %676 = vmatpush1.msra.mxu0 0.0
    %677 = vmatprep.subr.mxu0 0.0
    %678 = vmatpush1.msra.mxu0 0.0
    %679 = vmatprep.subr.mxu0 0.0
    %680 = vmatpush1.msra.mxu0 0.0
    %681 = vmatprep.subr.mxu0 0.0
    %682 = vmatpush1.msra.mxu0 0.0
    %683 = vmatprep.subr.mxu0 0.0
    %684 = vmatpush1.msra.mxu0 0.0
    %685 = vmatprep.subr.mxu0 0.0
    %686 = vmatpush1.msra.mxu0 0.0
    %687 = vmatprep.subr.mxu0 0.0
    %688 = vmatpush1.msra.mxu0 0.0
    %689 = vmatprep.subr.mxu0 0.0
    %690 = vmatpush1.msra.mxu0 0.0
    %691 = vmatprep.subr.mxu0 0.0
    %692 = vmatpush1.msra.mxu0 0.0
    %693 = vmatprep.mubr.f32.mxu0 0.0
    %694 = vmatmul.mubr.f32.gmra.mrb[0].mxu0 %v627
    %v695 = vpop.f32.mrb[0].mxu0
    %v696 = vadd.f32 0.0, %v695
    %v697 = vpop.f32.mrb[0].mxu0
    %698 = vdwg.mxu0
    %v700 = vsel %vm109, %v625, 0
    %702 = vmatprep.subr.mxu0 0.0
    %703 = vmatpush1.msra.mxu0 %v93
    %704 = vmatprep.subr.mxu0 0.0
    %705 = vmatpush1.msra.mxu0 %v94
    %706 = vmatprep.subr.mxu0 0.0
    %707 = vmatpush1.msra.mxu0 %v95
    %708 = vmatprep.subr.mxu0 0.0
    %709 = vmatpush1.msra.mxu0 %v96
    %710 = vmatprep.subr.mxu0 0.0
    %711 = vmatpush1.msra.mxu0 0.0
    %712 = vmatprep.subr.mxu0 0.0
    %713 = vmatpush1.msra.mxu0 0.0
    %714 = vmatprep.subr.mxu0 0.0
    %715 = vmatpush1.msra.mxu0 0.0
    %716 = vmatprep.subr.mxu0 0.0
    %717 = vmatpush1.msra.mxu0 0.0
    %718 = vmatprep.subr.mxu0 0.0
    %719 = vmatpush1.msra.mxu0 0.0
    %720 = vmatprep.subr.mxu0 0.0
    %721 = vmatpush1.msra.mxu0 0.0
    %722 = vmatprep.subr.mxu0 0.0
    %723 = vmatpush1.msra.mxu0 0.0
    %724 = vmatprep.subr.mxu0 0.0
    %725 = vmatpush1.msra.mxu0 0.0
    %726 = vmatprep.subr.mxu0 0.0
    %727 = vmatpush1.msra.mxu0 0.0
    %728 = vmatprep.subr.mxu0 0.0
    %729 = vmatpush1.msra.mxu0 0.0
    %730 = vmatprep.subr.mxu0 0.0
    %731 = vmatpush1.msra.mxu0 0.0
    %732 = vmatprep.subr.mxu0 0.0
    %733 = vmatpush1.msra.mxu0 0.0
    %734 = vmatprep.subr.mxu0 0.0
    %735 = vmatpush1.msra.mxu0 0.0
    %736 = vmatprep.subr.mxu0 0.0
    %737 = vmatpush1.msra.mxu0 0.0
    %738 = vmatprep.subr.mxu0 0.0
    %739 = vmatpush1.msra.mxu0 0.0
    %740 = vmatprep.subr.mxu0 0.0
    %741 = vmatpush1.msra.mxu0 0.0
    %742 = vmatprep.subr.mxu0 0.0
    %743 = vmatpush1.msra.mxu0 0.0
    %744 = vmatprep.subr.mxu0 0.0
    %745 = vmatpush1.msra.mxu0 0.0
    %746 = vmatprep.subr.mxu0 0.0
    %747 = vmatpush1.msra.mxu0 0.0
    %748 = vmatprep.subr.mxu0 0.0
    %749 = vmatpush1.msra.mxu0 0.0
    %750 = vmatprep.subr.mxu0 0.0
    %751 = vmatpush1.msra.mxu0 0.0
    %752 = vmatprep.subr.mxu0 0.0
    %753 = vmatpush1.msra.mxu0 0.0
    %754 = vmatprep.subr.mxu0 0.0
    %755 = vmatpush1.msra.mxu0 0.0
    %756 = vmatprep.subr.mxu0 0.0
    %757 = vmatpush1.msra.mxu0 0.0
    %758 = vmatprep.subr.mxu0 0.0
    %759 = vmatpush1.msra.mxu0 0.0
    %760 = vmatprep.subr.mxu0 0.0
    %761 = vmatpush1.msra.mxu0 0.0
    %762 = vmatprep.subr.mxu0 0.0
    %763 = vmatpush1.msra.mxu0 0.0
    %764 = vmatprep.subr.mxu0 0.0
    %765 = vmatpush1.msra.mxu0 0.0
    %766 = vmatprep.mubr.f32.mxu0 0.0
    %767 = vmatmul.mubr.f32.gmra.mrb[0].mxu0 %v700
    %v768 = vpop.f32.mrb[0].mxu0
    %v769 = vadd.f32 %v696, %v768
    %v770 = vpop.f32.mrb[0].mxu0
    %771 = vdwg.mxu0
    %v772 = vadd.f32 %v769, %v106
    %v773 = vtanh.pop %v772
    %s774 = scalar_lea.vmem [#allocation3], 6
    %v775 = vld [vmem:[%s774] sm:$0x3]
    %776 = vmatprep.subr.mxu0 0.0
    %777 = vmatpush1.msra.mxu0 %v89
    %778 = vmatprep.subr.mxu0 0.0
    %779 = vmatpush1.msra.mxu0 %v90
    %780 = vmatprep.subr.mxu0 0.0
    %781 = vmatpush1.msra.mxu0 %v91
    %782 = vmatprep.subr.mxu0 0.0
    %783 = vmatpush1.msra.mxu0 %v92
    %784 = vmatprep.subr.mxu0 0.0
    %785 = vmatpush1.msra.mxu0 0.0
    %786 = vmatprep.subr.mxu0 0.0
    %787 = vmatpush1.msra.mxu0 0.0
    %788 = vmatprep.subr.mxu0 0.0
    %789 = vmatpush1.msra.mxu0 0.0
    %790 = vmatprep.subr.mxu0 0.0
    %791 = vmatpush1.msra.mxu0 0.0
    %792 = vmatprep.subr.mxu0 0.0
    %793 = vmatpush1.msra.mxu0 0.0
    %794 = vmatprep.subr.mxu0 0.0
    %795 = vmatpush1.msra.mxu0 0.0
    %796 = vmatprep.subr.mxu0 0.0
    %797 = vmatpush1.msra.mxu0 0.0
    %798 = vmatprep.subr.mxu0 0.0
    %799 = vmatpush1.msra.mxu0 0.0
    %800 = vmatprep.subr.mxu0 0.0
    %801 = vmatpush1.msra.mxu0 0.0
    %802 = vmatprep.subr.mxu0 0.0
    %803 = vmatpush1.msra.mxu0 0.0
    %804 = vmatprep.subr.mxu0 0.0
    %805 = vmatpush1.msra.mxu0 0.0
    %806 = vmatprep.subr.mxu0 0.0
    %807 = vmatpush1.msra.mxu0 0.0
    %808 = vmatprep.subr.mxu0 0.0
    %809 = vmatpush1.msra.mxu0 0.0
    %810 = vmatprep.subr.mxu0 0.0
    %811 = vmatpush1.msra.mxu0 0.0
    %812 = vmatprep.subr.mxu0 0.0
    %813 = vmatpush1.msra.mxu0 0.0
    %814 = vmatprep.subr.mxu0 0.0
    %815 = vmatpush1.msra.mxu0 0.0
    %816 = vmatprep.subr.mxu0 0.0
    %817 = vmatpush1.msra.mxu0 0.0
    %818 = vmatprep.subr.mxu0 0.0
    %819 = vmatpush1.msra.mxu0 0.0
    %820 = vmatprep.subr.mxu0 0.0
    %821 = vmatpush1.msra.mxu0 0.0
    %822 = vmatprep.subr.mxu0 0.0
    %823 = vmatpush1.msra.mxu0 0.0
    %824 = vmatprep.subr.mxu0 0.0
    %825 = vmatpush1.msra.mxu0 0.0
    %826 = vmatprep.subr.mxu0 0.0
    %827 = vmatpush1.msra.mxu0 0.0
    %828 = vmatprep.subr.mxu0 0.0
    %829 = vmatpush1.msra.mxu0 0.0
    %830 = vmatprep.subr.mxu0 0.0
    %831 = vmatpush1.msra.mxu0 0.0
    %832 = vmatprep.subr.mxu0 0.0
    %833 = vmatpush1.msra.mxu0 0.0
    %834 = vmatprep.subr.mxu0 0.0
    %835 = vmatpush1.msra.mxu0 0.0
    %836 = vmatprep.subr.mxu0 0.0
    %837 = vmatpush1.msra.mxu0 0.0
    %838 = vmatprep.subr.mxu0 0.0
    %839 = vmatpush1.msra.mxu0 0.0
    %840 = vmatprep.mubr.f32.mxu0 0.0
    %841 = vmatmul.mubr.f32.gmra.mrb[0].mxu0 %v700
    %v842 = vpop.f32.mrb[0].mxu0
    %v843 = vadd.f32 0.0, %v842
    %v844 = vpop.f32.mrb[0].mxu0
    %845 = vdwg.mxu0
    %v846 = vadd.f32 %v775, %v843
    %v847 = vtanh.pop %v846
    %v849 = vsel %vm109, %v773, 0
    %851 = vmatprep.subr.mxu0 0.0
    %852 = vmatpush1.msra.mxu0 %v97
    %853 = vmatprep.subr.mxu0 0.0
    %854 = vmatpush1.msra.mxu0 %v98
    %855 = vmatprep.subr.mxu0 0.0
    %856 = vmatpush1.msra.mxu0 %v99
    %857 = vmatprep.subr.mxu0 0.0
    %858 = vmatpush1.msra.mxu0 %v100
    %859 = vmatprep.subr.mxu0 0.0
    %860 = vmatpush1.msra.mxu0 0.0
    %861 = vmatprep.subr.mxu0 0.0
    %862 = vmatpush1.msra.mxu0 0.0
    %863 = vmatprep.subr.mxu0 0.0
    %864 = vmatpush1.msra.mxu0 0.0
    %865 = vmatprep.subr.mxu0 0.0
    %866 = vmatpush1.msra.mxu0 0.0
    %867 = vmatprep.subr.mxu0 0.0
    %868 = vmatpush1.msra.mxu0 0.0
    %869 = vmatprep.subr.mxu0 0.0
    %870 = vmatpush1.msra.mxu0 0.0
    %871 = vmatprep.subr.mxu0 0.0
    %872 = vmatpush1.msra.mxu0 0.0
    %873 = vmatprep.subr.mxu0 0.0
    %874 = vmatpush1.msra.mxu0 0.0
    %875 = vmatprep.subr.mxu0 0.0
    %876 = vmatpush1.msra.mxu0 0.0
    %877 = vmatprep.subr.mxu0 0.0
    %878 = vmatpush1.msra.mxu0 0.0
    %879 = vmatprep.subr.mxu0 0.0
    %880 = vmatpush1.msra.mxu0 0.0
    %881 = vmatprep.subr.mxu0 0.0
    %882 = vmatpush1.msra.mxu0 0.0
    %883 = vmatprep.subr.mxu0 0.0
    %884 = vmatpush1.msra.mxu0 0.0
    %885 = vmatprep.subr.mxu0 0.0
    %886 = vmatpush1.msra.mxu0 0.0
    %887 = vmatprep.subr.mxu0 0.0
    %888 = vmatpush1.msra.mxu0 0.0
    %889 = vmatprep.subr.mxu0 0.0
    %890 = vmatpush1.msra.mxu0 0.0
    %891 = vmatprep.subr.mxu0 0.0
    %892 = vmatpush1.msra.mxu0 0.0
    %893 = vmatprep.subr.mxu0 0.0
    %894 = vmatpush1.msra.mxu0 0.0
    %895 = vmatprep.subr.mxu0 0.0
    %896 = vmatpush1.msra.mxu0 0.0
    %897 = vmatprep.subr.mxu0 0.0
    %898 = vmatpush1.msra.mxu0 0.0
    %899 = vmatprep.subr.mxu0 0.0
    %900 = vmatpush1.msra.mxu0 0.0
    %901 = vmatprep.subr.mxu0 0.0
    %902 = vmatpush1.msra.mxu0 0.0
    %903 = vmatprep.subr.mxu0 0.0
    %904 = vmatpush1.msra.mxu0 0.0
    %905 = vmatprep.subr.mxu0 0.0
    %906 = vmatpush1.msra.mxu0 0.0
    %907 = vmatprep.subr.mxu0 0.0
    %908 = vmatpush1.msra.mxu0 0.0
    %909 = vmatprep.subr.mxu0 0.0
    %910 = vmatpush1.msra.mxu0 0.0
    %911 = vmatprep.subr.mxu0 0.0
    %912 = vmatpush1.msra.mxu0 0.0
    %913 = vmatprep.subr.mxu0 0.0
    %914 = vmatpush1.msra.mxu0 0.0
    %915 = vmatprep.mubr.f32.mxu0 0.0
    %916 = vmatmul.mubr.f32.gmra.mrb[0].mxu0 %v849
    %v917 = vpop.f32.mrb[0].mxu0
    %v918 = vadd.f32 0.0, %v917
    %v919 = vpop.f32.mrb[0].mxu0
    %920 = vdwg.mxu0
    %v922 = vsel %vm109, %v847, 0
    %924 = vmatprep.subr.mxu0 0.0
    %925 = vmatpush1.msra.mxu0 %v93
    %926 = vmatprep.subr.mxu0 0.0
    %927 = vmatpush1.msra.mxu0 %v94
    %928 = vmatprep.subr.mxu0 0.0
    %929 = vmatpush1.msra.mxu0 %v95
    %930 = vmatprep.subr.mxu0 0.0
    %931 = vmatpush1.msra.mxu0 %v96
    %932 = vmatprep.subr.mxu0 0.0
    %933 = vmatpush1.msra.mxu0 0.0
    %934 = vmatprep.subr.mxu0 0.0
    %935 = vmatpush1.msra.mxu0 0.0
    %936 = vmatprep.subr.mxu0 0.0
    %937 = vmatpush1.msra.mxu0 0.0
    %938 = vmatprep.subr.mxu0 0.0
    %939 = vmatpush1.msra.mxu0 0.0
    %940 = vmatprep.subr.mxu0 0.0
    %941 = vmatpush1.msra.mxu0 0.0
    %942 = vmatprep.subr.mxu0 0.0
    %943 = vmatpush1.msra.mxu0 0.0
    %944 = vmatprep.subr.mxu0 0.0
    %945 = vmatpush1.msra.mxu0 0.0
    %946 = vmatprep.subr.mxu0 0.0
    %947 = vmatpush1.msra.mxu0 0.0
    %948 = vmatprep.subr.mxu0 0.0
    %949 = vmatpush1.msra.mxu0 0.0
    %950 = vmatprep.subr.mxu0 0.0
    %951 = vmatpush1.msra.mxu0 0.0
    %952 = vmatprep.subr.mxu0 0.0
    %953 = vmatpush1.msra.mxu0 0.0
    %954 = vmatprep.subr.mxu0 0.0
    %955 = vmatpush1.msra.mxu0 0.0
    %956 = vmatprep.subr.mxu0 0.0
    %957 = vmatpush1.msra.mxu0 0.0
    %958 = vmatprep.subr.mxu0 0.0
    %959 = vmatpush1.msra.mxu0 0.0
    %960 = vmatprep.subr.mxu0 0.0
    %961 = vmatpush1.msra.mxu0 0.0
    %962 = vmatprep.subr.mxu0 0.0
    %963 = vmatpush1.msra.mxu0 0.0
    %964 = vmatprep.subr.mxu0 0.0
    %965 = vmatpush1.msra.mxu0 0.0
    %966 = vmatprep.subr.mxu0 0.0
    %967 = vmatpush1.msra.mxu0 0.0
    %968 = vmatprep.subr.mxu0 0.0
    %969 = vmatpush1.msra.mxu0 0.0
    %970 = vmatprep.subr.mxu0 0.0
    %971 = vmatpush1.msra.mxu0 0.0
    %972 = vmatprep.subr.mxu0 0.0
    %973 = vmatpush1.msra.mxu0 0.0
    %974 = vmatprep.subr.mxu0 0.0
    %975 = vmatpush1.msra.mxu0 0.0
    %976 = vmatprep.subr.mxu0 0.0
    %977 = vmatpush1.msra.mxu0 0.0
    %978 = vmatprep.subr.mxu0 0.0
    %979 = vmatpush1.msra.mxu0 0.0
    %980 = vmatprep.subr.mxu0 0.0
    %981 = vmatpush1.msra.mxu0 0.0
    %982 = vmatprep.subr.mxu0 0.0
    %983 = vmatpush1.msra.mxu0 0.0
    %984 = vmatprep.subr.mxu0 0.0
    %985 = vmatpush1.msra.mxu0 0.0
    %986 = vmatprep.subr.mxu0 0.0
    %987 = vmatpush1.msra.mxu0 0.0
    %988 = vmatprep.mubr.f32.mxu0 0.0
    %989 = vmatmul.mubr.f32.gmra.mrb[0].mxu0 %v922
    %v990 = vpop.f32.mrb[0].mxu0
    %v991 = vadd.f32 %v918, %v990
    %v992 = vpop.f32.mrb[0].mxu0
    %993 = vdwg.mxu0
    %v994 = vadd.f32 %v991, %v106
    %v995 = vtanh.pop %v994
    %s996 = scalar_lea.vmem [#allocation3], 8
    %v997 = vld [vmem:[%s996] sm:$0x3]
    %998 = vmatprep.subr.mxu0 0.0
    %999 = vmatpush1.msra.mxu0 %v89
    %1000 = vmatprep.subr.mxu0 0.0
    %1001 = vmatpush1.msra.mxu0 %v90
    %1002 = vmatprep.subr.mxu0 0.0
    %1003 = vmatpush1.msra.mxu0 %v91
    %1004 = vmatprep.subr.mxu0 0.0
    %1005 = vmatpush1.msra.mxu0 %v92
    %1006 = vmatprep.subr.mxu0 0.0
    %1007 = vmatpush1.msra.mxu0 0.0
    %1008 = vmatprep.subr.mxu0 0.0
    %1009 = vmatpush1.msra.mxu0 0.0
    %1010 = vmatprep.subr.mxu0 0.0
    %1011 = vmatpush1.msra.mxu0 0.0
    %1012 = vmatprep.subr.mxu0 0.0
    %1013 = vmatpush1.msra.mxu0 0.0
    %1014 = vmatprep.subr.mxu0 0.0
    %1015 = vmatpush1.msra.mxu0 0.0
    %1016 = vmatprep.subr.mxu0 0.0
    %1017 = vmatpush1.msra.mxu0 0.0
    %1018 = vmatprep.subr.mxu0 0.0
    %1019 = vmatpush1.msra.mxu0 0.0
    %1020 = vmatprep.subr.mxu0 0.0
    %1021 = vmatpush1.msra.mxu0 0.0
    %1022 = vmatprep.subr.mxu0 0.0
    %1023 = vmatpush1.msra.mxu0 0.0
    %1024 = vmatprep.subr.mxu0 0.0
    %1025 = vmatpush1.msra.mxu0 0.0
    %1026 = vmatprep.subr.mxu0 0.0
    %1027 = vmatpush1.msra.mxu0 0.0
    %1028 = vmatprep.subr.mxu0 0.0
    %1029 = vmatpush1.msra.mxu0 0.0
    %1030 = vmatprep.subr.mxu0 0.0
    %1031 = vmatpush1.msra.mxu0 0.0
    %1032 = vmatprep.subr.mxu0 0.0
    %1033 = vmatpush1.msra.mxu0 0.0
    %1034 = vmatprep.subr.mxu0 0.0
    %1035 = vmatpush1.msra.mxu0 0.0
    %1036 = vmatprep.subr.mxu0 0.0
    %1037 = vmatpush1.msra.mxu0 0.0
    %1038 = vmatprep.subr.mxu0 0.0
    %1039 = vmatpush1.msra.mxu0 0.0
    %1040 = vmatprep.subr.mxu0 0.0
    %1041 = vmatpush1.msra.mxu0 0.0
    %1042 = vmatprep.subr.mxu0 0.0
    %1043 = vmatpush1.msra.mxu0 0.0
    %1044 = vmatprep.subr.mxu0 0.0
    %1045 = vmatpush1.msra.mxu0 0.0
    %1046 = vmatprep.subr.mxu0 0.0
    %1047 = vmatpush1.msra.mxu0 0.0
    %1048 = vmatprep.subr.mxu0 0.0
    %1049 = vmatpush1.msra.mxu0 0.0
    %1050 = vmatprep.subr.mxu0 0.0
    %1051 = vmatpush1.msra.mxu0 0.0
    %1052 = vmatprep.subr.mxu0 0.0
    %1053 = vmatpush1.msra.mxu0 0.0
    %1054 = vmatprep.subr.mxu0 0.0
    %1055 = vmatpush1.msra.mxu0 0.0
    %1056 = vmatprep.subr.mxu0 0.0
    %1057 = vmatpush1.msra.mxu0 0.0
    %1058 = vmatprep.subr.mxu0 0.0
    %1059 = vmatpush1.msra.mxu0 0.0
    %1060 = vmatprep.subr.mxu0 0.0
    %1061 = vmatpush1.msra.mxu0 0.0
    %1062 = vmatprep.mubr.f32.mxu0 0.0
    %1063 = vmatmul.mubr.f32.gmra.mrb[0].mxu0 %v922
    %v1064 = vpop.f32.mrb[0].mxu0
    %v1065 = vadd.f32 0.0, %v1064
    %v1066 = vpop.f32.mrb[0].mxu0
    %1067 = vdwg.mxu0
    %v1068 = vadd.f32 %v997, %v1065
    %v1069 = vtanh.pop %v1068
    %v1071 = vsel %vm109, %v995, 0
    %1073 = vmatprep.subr.mxu0 0.0
    %1074 = vmatpush1.msra.mxu0 %v97
    %1075 = vmatprep.subr.mxu0 0.0
    %1076 = vmatpush1.msra.mxu0 %v98
    %1077 = vmatprep.subr.mxu0 0.0
    %1078 = vmatpush1.msra.mxu0 %v99
    %1079 = vmatprep.subr.mxu0 0.0
    %1080 = vmatpush1.msra.mxu0 %v100
    %1081 = vmatprep.subr.mxu0 0.0
    %1082 = vmatpush1.msra.mxu0 0.0
    %1083 = vmatprep.subr.mxu0 0.0
    %1084 = vmatpush1.msra.mxu0 0.0
    %1085 = vmatprep.subr.mxu0 0.0
    %1086 = vmatpush1.msra.mxu0 0.0
    %1087 = vmatprep.subr.mxu0 0.0
    %1088 = vmatpush1.msra.mxu0 0.0
    %1089 = vmatprep.subr.mxu0 0.0
    %1090 = vmatpush1.msra.mxu0 0.0
    %1091 = vmatprep.subr.mxu0 0.0
    %1092 = vmatpush1.msra.mxu0 0.0
    %1093 = vmatprep.subr.mxu0 0.0
    %1094 = vmatpush1.msra.mxu0 0.0
    %1095 = vmatprep.subr.mxu0 0.0
    %1096 = vmatpush1.msra.mxu0 0.0
    %1097 = vmatprep.subr.mxu0 0.0
    %1098 = vmatpush1.msra.mxu0 0.0
    %1099 = vmatprep.subr.mxu0 0.0
    %1100 = vmatpush1.msra.mxu0 0.0
    %1101 = vmatprep.subr.mxu0 0.0
    %1102 = vmatpush1.msra.mxu0 0.0
    %1103 = vmatprep.subr.mxu0 0.0
    %1104 = vmatpush1.msra.mxu0 0.0
    %1105 = vmatprep.subr.mxu0 0.0
    %1106 = vmatpush1.msra.mxu0 0.0
    %1107 = vmatprep.subr.mxu0 0.0
    %1108 = vmatpush1.msra.mxu0 0.0
    %1109 = vmatprep.subr.mxu0 0.0
    %1110 = vmatpush1.msra.mxu0 0.0
    %1111 = vmatprep.subr.mxu0 0.0
    %1112 = vmatpush1.msra.mxu0 0.0
    %1113 = vmatprep.subr.mxu0 0.0
    %1114 = vmatpush1.msra.mxu0 0.0
    %1115 = vmatprep.subr.mxu0 0.0
    %1116 = vmatpush1.msra.mxu0 0.0
    %1117 = vmatprep.subr.mxu0 0.0
    %1118 = vmatpush1.msra.mxu0 0.0
    %1119 = vmatprep.subr.mxu0 0.0
    %1120 = vmatpush1.msra.mxu0 0.0
    %1121 = vmatprep.subr.mxu0 0.0
    %1122 = vmatpush1.msra.mxu0 0.0
    %1123 = vmatprep.subr.mxu0 0.0
    %1124 = vmatpush1.msra.mxu0 0.0
    %1125 = vmatprep.subr.mxu0 0.0
    %1126 = vmatpush1.msra.mxu0 0.0
    %1127 = vmatprep.subr.mxu0 0.0
    %1128 = vmatpush1.msra.mxu0 0.0
    %1129 = vmatprep.subr.mxu0 0.0
    %1130 = vmatpush1.msra.mxu0 0.0
    %1131 = vmatprep.subr.mxu0 0.0
    %1132 = vmatpush1.msra.mxu0 0.0
    %1133 = vmatprep.subr.mxu0 0.0
    %1134 = vmatpush1.msra.mxu0 0.0
    %1135 = vmatprep.subr.mxu0 0.0
    %1136 = vmatpush1.msra.mxu0 0.0
    %1137 = vmatprep.mubr.f32.mxu0 0.0
    %1138 = vmatmul.mubr.f32.gmra.mrb[0].mxu0 %v1071
    %v1139 = vpop.f32.mrb[0].mxu0
    %v1140 = vadd.f32 0.0, %v1139
    %v1141 = vpop.f32.mrb[0].mxu0
    %1142 = vdwg.mxu0
    %v1144 = vsel %vm109, %v1069, 0
    %1146 = vmatprep.subr.mxu0 0.0
    %1147 = vmatpush1.msra.mxu0 %v93
    %1148 = vmatprep.subr.mxu0 0.0
    %1149 = vmatpush1.msra.mxu0 %v94
    %1150 = vmatprep.subr.mxu0 0.0
    %1151 = vmatpush1.msra.mxu0 %v95
    %1152 = vmatprep.subr.mxu0 0.0
    %1153 = vmatpush1.msra.mxu0 %v96
    %1154 = vmatprep.subr.mxu0 0.0
    %1155 = vmatpush1.msra.mxu0 0.0
    %1156 = vmatprep.subr.mxu0 0.0
    %1157 = vmatpush1.msra.mxu0 0.0
    %1158 = vmatprep.subr.mxu0 0.0
    %1159 = vmatpush1.msra.mxu0 0.0
    %1160 = vmatprep.subr.mxu0 0.0
    %1161 = vmatpush1.msra.mxu0 0.0
    %1162 = vmatprep.subr.mxu0 0.0
    %1163 = vmatpush1.msra.mxu0 0.0
    %1164 = vmatprep.subr.mxu0 0.0
    %1165 = vmatpush1.msra.mxu0 0.0
    %1166 = vmatprep.subr.mxu0 0.0
    %1167 = vmatpush1.msra.mxu0 0.0
    %1168 = vmatprep.subr.mxu0 0.0
    %1169 = vmatpush1.msra.mxu0 0.0
    %1170 = vmatprep.subr.mxu0 0.0
    %1171 = vmatpush1.msra.mxu0 0.0
    %1172 = vmatprep.subr.mxu0 0.0
    %1173 = vmatpush1.msra.mxu0 0.0
    %1174 = vmatprep.subr.mxu0 0.0
    %1175 = vmatpush1.msra.mxu0 0.0
    %1176 = vmatprep.subr.mxu0 0.0
    %1177 = vmatpush1.msra.mxu0 0.0
    %1178 = vmatprep.subr.mxu0 0.0
    %1179 = vmatpush1.msra.mxu0 0.0
    %1180 = vmatprep.subr.mxu0 0.0
    %1181 = vmatpush1.msra.mxu0 0.0
    %1182 = vmatprep.subr.mxu0 0.0
    %1183 = vmatpush1.msra.mxu0 0.0
    %1184 = vmatprep.subr.mxu0 0.0
    %1185 = vmatpush1.msra.mxu0 0.0
    %1186 = vmatprep.subr.mxu0 0.0
    %1187 = vmatpush1.msra.mxu0 0.0
    %1188 = vmatprep.subr.mxu0 0.0
    %1189 = vmatpush1.msra.mxu0 0.0
    %1190 = vmatprep.subr.mxu0 0.0
    %1191 = vmatpush1.msra.mxu0 0.0
    %1192 = vmatprep.subr.mxu0 0.0
    %1193 = vmatpush1.msra.mxu0 0.0
    %1194 = vmatprep.subr.mxu0 0.0
    %1195 = vmatpush1.msra.mxu0 0.0
    %1196 = vmatprep.subr.mxu0 0.0
    %1197 = vmatpush1.msra.mxu0 0.0
    %1198 = vmatprep.subr.mxu0 0.0
    %1199 = vmatpush1.msra.mxu0 0.0
    %1200 = vmatprep.subr.mxu0 0.0
    %1201 = vmatpush1.msra.mxu0 0.0
    %1202 = vmatprep.subr.mxu0 0.0
    %1203 = vmatpush1.msra.mxu0 0.0
    %1204 = vmatprep.subr.mxu0 0.0
    %1205 = vmatpush1.msra.mxu0 0.0
    %1206 = vmatprep.subr.mxu0 0.0
    %1207 = vmatpush1.msra.mxu0 0.0
    %1208 = vmatprep.subr.mxu0 0.0
    %1209 = vmatpush1.msra.mxu0 0.0
    %1210 = vmatprep.mubr.f32.mxu0 0.0
    %1211 = vmatmul.mubr.f32.gmra.mrb[0].mxu0 %v1144
    %v1212 = vpop.f32.mrb[0].mxu0
    %v1213 = vadd.f32 %v1140, %v1212
    %v1214 = vpop.f32.mrb[0].mxu0
    %1215 = vdwg.mxu0
    %v1216 = vadd.f32 %v1213, %v106
    %v1217 = vtanh.pop %v1216
    %s1218 = scalar_lea.vmem [#allocation3], 10
    %v1219 = vld [vmem:[%s1218] sm:$0x3]
    %1220 = vmatprep.subr.mxu0 0.0
    %1221 = vmatpush1.msra.mxu0 %v89
    %1222 = vmatprep.subr.mxu0 0.0
    %1223 = vmatpush1.msra.mxu0 %v90
    %1224 = vmatprep.subr.mxu0 0.0
    %1225 = vmatpush1.msra.mxu0 %v91
    %1226 = vmatprep.subr.mxu0 0.0
    %1227 = vmatpush1.msra.mxu0 %v92
    %1228 = vmatprep.subr.mxu0 0.0
    %1229 = vmatpush1.msra.mxu0 0.0
    %1230 = vmatprep.subr.mxu0 0.0
    %1231 = vmatpush1.msra.mxu0 0.0
    %1232 = vmatprep.subr.mxu0 0.0
    %1233 = vmatpush1.msra.mxu0 0.0
    %1234 = vmatprep.subr.mxu0 0.0
    %1235 = vmatpush1.msra.mxu0 0.0
    %1236 = vmatprep.subr.mxu0 0.0
    %1237 = vmatpush1.msra.mxu0 0.0
    %1238 = vmatprep.subr.mxu0 0.0
    %1239 = vmatpush1.msra.mxu0 0.0
    %1240 = vmatprep.subr.mxu0 0.0
    %1241 = vmatpush1.msra.mxu0 0.0
    %1242 = vmatprep.subr.mxu0 0.0
    %1243 = vmatpush1.msra.mxu0 0.0
    %1244 = vmatprep.subr.mxu0 0.0
    %1245 = vmatpush1.msra.mxu0 0.0
    %1246 = vmatprep.subr.mxu0 0.0
    %1247 = vmatpush1.msra.mxu0 0.0
    %1248 = vmatprep.subr.mxu0 0.0
    %1249 = vmatpush1.msra.mxu0 0.0
    %1250 = vmatprep.subr.mxu0 0.0
    %1251 = vmatpush1.msra.mxu0 0.0
    %1252 = vmatprep.subr.mxu0 0.0
    %1253 = vmatpush1.msra.mxu0 0.0
    %1254 = vmatprep.subr.mxu0 0.0
    %1255 = vmatpush1.msra.mxu0 0.0
    %1256 = vmatprep.subr.mxu0 0.0
    %1257 = vmatpush1.msra.mxu0 0.0
    %1258 = vmatprep.subr.mxu0 0.0
    %1259 = vmatpush1.msra.mxu0 0.0
    %1260 = vmatprep.subr.mxu0 0.0
    %1261 = vmatpush1.msra.mxu0 0.0
    %1262 = vmatprep.subr.mxu0 0.0
    %1263 = vmatpush1.msra.mxu0 0.0
    %1264 = vmatprep.subr.mxu0 0.0
    %1265 = vmatpush1.msra.mxu0 0.0
    %1266 = vmatprep.subr.mxu0 0.0
    %1267 = vmatpush1.msra.mxu0 0.0
    %1268 = vmatprep.subr.mxu0 0.0
    %1269 = vmatpush1.msra.mxu0 0.0
    %1270 = vmatprep.subr.mxu0 0.0
    %1271 = vmatpush1.msra.mxu0 0.0
    %1272 = vmatprep.subr.mxu0 0.0
    %1273 = vmatpush1.msra.mxu0 0.0
    %1274 = vmatprep.subr.mxu0 0.0
    %1275 = vmatpush1.msra.mxu0 0.0
    %1276 = vmatprep.subr.mxu0 0.0
    %1277 = vmatpush1.msra.mxu0 0.0
    %1278 = vmatprep.subr.mxu0 0.0
    %1279 = vmatpush1.msra.mxu0 0.0
    %1280 = vmatprep.subr.mxu0 0.0
    %1281 = vmatpush1.msra.mxu0 0.0
    %1282 = vmatprep.subr.mxu0 0.0
    %1283 = vmatpush1.msra.mxu0 0.0
    %1284 = vmatprep.mubr.f32.mxu0 0.0
    %1285 = vmatmul.mubr.f32.gmra.mrb[0].mxu0 %v1144
    %v1286 = vpop.f32.mrb[0].mxu0
    %v1287 = vadd.f32 0.0, %v1286
    %v1288 = vpop.f32.mrb[0].mxu0
    %1289 = vdwg.mxu0
    %v1290 = vadd.f32 %v1219, %v1287
    %v1291 = vtanh.pop %v1290
    %v1293 = vsel %vm109, %v1217, 0
    %1295 = vmatprep.subr.mxu0 0.0
    %1296 = vmatpush1.msra.mxu0 %v97
    %1297 = vmatprep.subr.mxu0 0.0
    %1298 = vmatpush1.msra.mxu0 %v98
    %1299 = vmatprep.subr.mxu0 0.0
    %1300 = vmatpush1.msra.mxu0 %v99
    %1301 = vmatprep.subr.mxu0 0.0
    %1302 = vmatpush1.msra.mxu0 %v100
    %1303 = vmatprep.subr.mxu0 0.0
    %1304 = vmatpush1.msra.mxu0 0.0
    %1305 = vmatprep.subr.mxu0 0.0
    %1306 = vmatpush1.msra.mxu0 0.0
    %1307 = vmatprep.subr.mxu0 0.0
    %1308 = vmatpush1.msra.mxu0 0.0
    %1309 = vmatprep.subr.mxu0 0.0
    %1310 = vmatpush1.msra.mxu0 0.0
    %1311 = vmatprep.subr.mxu0 0.0
    %1312 = vmatpush1.msra.mxu0 0.0
    %1313 = vmatprep.subr.mxu0 0.0
    %1314 = vmatpush1.msra.mxu0 0.0
    %1315 = vmatprep.subr.mxu0 0.0
    %1316 = vmatpush1.msra.mxu0 0.0
    %1317 = vmatprep.subr.mxu0 0.0
    %1318 = vmatpush1.msra.mxu0 0.0
    %1319 = vmatprep.subr.mxu0 0.0
    %1320 = vmatpush1.msra.mxu0 0.0
    %1321 = vmatprep.subr.mxu0 0.0
    %1322 = vmatpush1.msra.mxu0 0.0
    %1323 = vmatprep.subr.mxu0 0.0
    %1324 = vmatpush1.msra.mxu0 0.0
    %1325 = vmatprep.subr.mxu0 0.0
    %1326 = vmatpush1.msra.mxu0 0.0
    %1327 = vmatprep.subr.mxu0 0.0
    %1328 = vmatpush1.msra.mxu0 0.0
    %1329 = vmatprep.subr.mxu0 0.0
    %1330 = vmatpush1.msra.mxu0 0.0
    %1331 = vmatprep.subr.mxu0 0.0
    %1332 = vmatpush1.msra.mxu0 0.0
    %1333 = vmatprep.subr.mxu0 0.0
    %1334 = vmatpush1.msra.mxu0 0.0
    %1335 = vmatprep.subr.mxu0 0.0
    %1336 = vmatpush1.msra.mxu0 0.0
    %1337 = vmatprep.subr.mxu0 0.0
    %1338 = vmatpush1.msra.mxu0 0.0
    %1339 = vmatprep.subr.mxu0 0.0
    %1340 = vmatpush1.msra.mxu0 0.0
    %1341 = vmatprep.subr.mxu0 0.0
    %1342 = vmatpush1.msra.mxu0 0.0
    %1343 = vmatprep.subr.mxu0 0.0
    %1344 = vmatpush1.msra.mxu0 0.0
    %1345 = vmatprep.subr.mxu0 0.0
    %1346 = vmatpush1.msra.mxu0 0.0
    %1347 = vmatprep.subr.mxu0 0.0
    %1348 = vmatpush1.msra.mxu0 0.0
    %1349 = vmatprep.subr.mxu0 0.0
    %1350 = vmatpush1.msra.mxu0 0.0
    %1351 = vmatprep.subr.mxu0 0.0
    %1352 = vmatpush1.msra.mxu0 0.0
    %1353 = vmatprep.subr.mxu0 0.0
    %1354 = vmatpush1.msra.mxu0 0.0
    %1355 = vmatprep.subr.mxu0 0.0
    %1356 = vmatpush1.msra.mxu0 0.0
    %1357 = vmatprep.subr.mxu0 0.0
    %1358 = vmatpush1.msra.mxu0 0.0
    %1359 = vmatprep.mubr.f32.mxu0 0.0
    %1360 = vmatmul.mubr.f32.gmra.mrb[0].mxu0 %v1293
    %v1361 = vpop.f32.mrb[0].mxu0
    %v1362 = vadd.f32 0.0, %v1361
    %v1363 = vpop.f32.mrb[0].mxu0
    %1364 = vdwg.mxu0
    %v1366 = vsel %vm109, %v1291, 0
    %1368 = vmatprep.subr.mxu0 0.0
    %1369 = vmatpush1.msra.mxu0 %v93
    %1370 = vmatprep.subr.mxu0 0.0
    %1371 = vmatpush1.msra.mxu0 %v94
    %1372 = vmatprep.subr.mxu0 0.0
    %1373 = vmatpush1.msra.mxu0 %v95
    %1374 = vmatprep.subr.mxu0 0.0
    %1375 = vmatpush1.msra.mxu0 %v96
    %1376 = vmatprep.subr.mxu0 0.0
    %1377 = vmatpush1.msra.mxu0 0.0
    %1378 = vmatprep.subr.mxu0 0.0
    %1379 = vmatpush1.msra.mxu0 0.0
    %1380 = vmatprep.subr.mxu0 0.0
    %1381 = vmatpush1.msra.mxu0 0.0
    %1382 = vmatprep.subr.mxu0 0.0
    %1383 = vmatpush1.msra.mxu0 0.0
    %1384 = vmatprep.subr.mxu0 0.0
    %1385 = vmatpush1.msra.mxu0 0.0
    %1386 = vmatprep.subr.mxu0 0.0
    %1387 = vmatpush1.msra.mxu0 0.0
    %1388 = vmatprep.subr.mxu0 0.0
    %1389 = vmatpush1.msra.mxu0 0.0
    %1390 = vmatprep.subr.mxu0 0.0
    %1391 = vmatpush1.msra.mxu0 0.0
    %1392 = vmatprep.subr.mxu0 0.0
    %1393 = vmatpush1.msra.mxu0 0.0
    %1394 = vmatprep.subr.mxu0 0.0
    %1395 = vmatpush1.msra.mxu0 0.0
    %1396 = vmatprep.subr.mxu0 0.0
    %1397 = vmatpush1.msra.mxu0 0.0
    %1398 = vmatprep.subr.mxu0 0.0
    %1399 = vmatpush1.msra.mxu0 0.0
    %1400 = vmatprep.subr.mxu0 0.0
    %1401 = vmatpush1.msra.mxu0 0.0
    %1402 = vmatprep.subr.mxu0 0.0
    %1403 = vmatpush1.msra.mxu0 0.0
    %1404 = vmatprep.subr.mxu0 0.0
    %1405 = vmatpush1.msra.mxu0 0.0
    %1406 = vmatprep.subr.mxu0 0.0
    %1407 = vmatpush1.msra.mxu0 0.0
    %1408 = vmatprep.subr.mxu0 0.0
    %1409 = vmatpush1.msra.mxu0 0.0
    %1410 = vmatprep.subr.mxu0 0.0
    %1411 = vmatpush1.msra.mxu0 0.0
    %1412 = vmatprep.subr.mxu0 0.0
    %1413 = vmatpush1.msra.mxu0 0.0
    %1414 = vmatprep.subr.mxu0 0.0
    %1415 = vmatpush1.msra.mxu0 0.0
    %1416 = vmatprep.subr.mxu0 0.0
    %1417 = vmatpush1.msra.mxu0 0.0
    %1418 = vmatprep.subr.mxu0 0.0
    %1419 = vmatpush1.msra.mxu0 0.0
    %1420 = vmatprep.subr.mxu0 0.0
    %1421 = vmatpush1.msra.mxu0 0.0
    %1422 = vmatprep.subr.mxu0 0.0
    %1423 = vmatpush1.msra.mxu0 0.0
    %1424 = vmatprep.subr.mxu0 0.0
    %1425 = vmatpush1.msra.mxu0 0.0
    %1426 = vmatprep.subr.mxu0 0.0
    %1427 = vmatpush1.msra.mxu0 0.0
    %1428 = vmatprep.subr.mxu0 0.0
    %1429 = vmatpush1.msra.mxu0 0.0
    %1430 = vmatprep.subr.mxu0 0.0
    %1431 = vmatpush1.msra.mxu0 0.0
    %1432 = vmatprep.mubr.f32.mxu0 0.0
    %1433 = vmatmul.mubr.f32.gmra.mrb[0].mxu0 %v1366
    %v1434 = vpop.f32.mrb[0].mxu0
    %v1435 = vadd.f32 %v1362, %v1434
    %v1436 = vpop.f32.mrb[0].mxu0
    %1437 = vdwg.mxu0
    %v1438 = vadd.f32 %v1435, %v106
    %v1439 = vtanh.pop %v1438
    %s1440 = scalar_lea.vmem [#allocation3], 12
    %v1441 = vld [vmem:[%s1440] sm:$0x3]
    %1442 = vmatprep.subr.mxu0 0.0
    %1443 = vmatpush1.msra.mxu0 %v89
    %1444 = vmatprep.subr.mxu0 0.0
    %1445 = vmatpush1.msra.mxu0 %v90
    %1446 = vmatprep.subr.mxu0 0.0
    %1447 = vmatpush1.msra.mxu0 %v91
    %1448 = vmatprep.subr.mxu0 0.0
    %1449 = vmatpush1.msra.mxu0 %v92
    %1450 = vmatprep.subr.mxu0 0.0
    %1451 = vmatpush1.msra.mxu0 0.0
    %1452 = vmatprep.subr.mxu0 0.0
    %1453 = vmatpush1.msra.mxu0 0.0
    %1454 = vmatprep.subr.mxu0 0.0
    %1455 = vmatpush1.msra.mxu0 0.0
    %1456 = vmatprep.subr.mxu0 0.0
    %1457 = vmatpush1.msra.mxu0 0.0
    %1458 = vmatprep.subr.mxu0 0.0
    %1459 = vmatpush1.msra.mxu0 0.0
    %1460 = vmatprep.subr.mxu0 0.0
    %1461 = vmatpush1.msra.mxu0 0.0
    %1462 = vmatprep.subr.mxu0 0.0
    %1463 = vmatpush1.msra.mxu0 0.0
    %1464 = vmatprep.subr.mxu0 0.0
    %1465 = vmatpush1.msra.mxu0 0.0
    %1466 = vmatprep.subr.mxu0 0.0
    %1467 = vmatpush1.msra.mxu0 0.0
    %1468 = vmatprep.subr.mxu0 0.0
    %1469 = vmatpush1.msra.mxu0 0.0
    %1470 = vmatprep.subr.mxu0 0.0
    %1471 = vmatpush1.msra.mxu0 0.0
    %1472 = vmatprep.subr.mxu0 0.0
    %1473 = vmatpush1.msra.mxu0 0.0
    %1474 = vmatprep.subr.mxu0 0.0
    %1475 = vmatpush1.msra.mxu0 0.0
    %1476 = vmatprep.subr.mxu0 0.0
    %1477 = vmatpush1.msra.mxu0 0.0
    %1478 = vmatprep.subr.mxu0 0.0
    %1479 = vmatpush1.msra.mxu0 0.0
    %1480 = vmatprep.subr.mxu0 0.0
    %1481 = vmatpush1.msra.mxu0 0.0
    %1482 = vmatprep.subr.mxu0 0.0
    %1483 = vmatpush1.msra.mxu0 0.0
    %1484 = vmatprep.subr.mxu0 0.0
    %1485 = vmatpush1.msra.mxu0 0.0
    %1486 = vmatprep.subr.mxu0 0.0
    %1487 = vmatpush1.msra.mxu0 0.0
    %1488 = vmatprep.subr.mxu0 0.0
    %1489 = vmatpush1.msra.mxu0 0.0
    %1490 = vmatprep.subr.mxu0 0.0
    %1491 = vmatpush1.msra.mxu0 0.0
    %1492 = vmatprep.subr.mxu0 0.0
    %1493 = vmatpush1.msra.mxu0 0.0
    %1494 = vmatprep.subr.mxu0 0.0
    %1495 = vmatpush1.msra.mxu0 0.0
    %1496 = vmatprep.subr.mxu0 0.0
    %1497 = vmatpush1.msra.mxu0 0.0
    %1498 = vmatprep.subr.mxu0 0.0
    %1499 = vmatpush1.msra.mxu0 0.0
    %1500 = vmatprep.subr.mxu0 0.0
    %1501 = vmatpush1.msra.mxu0 0.0
    %1502 = vmatprep.subr.mxu0 0.0
    %1503 = vmatpush1.msra.mxu0 0.0
    %1504 = vmatprep.subr.mxu0 0.0
    %1505 = vmatpush1.msra.mxu0 0.0
    %1506 = vmatprep.mubr.f32.mxu0 0.0
    %1507 = vmatmul.mubr.f32.gmra.mrb[0].mxu0 %v1366
    %v1508 = vpop.f32.mrb[0].mxu0
    %v1509 = vadd.f32 0.0, %v1508
    %v1510 = vpop.f32.mrb[0].mxu0
    %1511 = vdwg.mxu0
    %v1512 = vadd.f32 %v1441, %v1509
    %v1513 = vtanh.pop %v1512
    %v1515 = vsel %vm109, %v1439, 0
    %1517 = vmatprep.subr.mxu0 0.0
    %1518 = vmatpush1.msra.mxu0 %v97
    %1519 = vmatprep.subr.mxu0 0.0
    %1520 = vmatpush1.msra.mxu0 %v98
    %1521 = vmatprep.subr.mxu0 0.0
    %1522 = vmatpush1.msra.mxu0 %v99
    %1523 = vmatprep.subr.mxu0 0.0
    %1524 = vmatpush1.msra.mxu0 %v100
    %1525 = vmatprep.subr.mxu0 0.0
    %1526 = vmatpush1.msra.mxu0 0.0
    %1527 = vmatprep.subr.mxu0 0.0
    %1528 = vmatpush1.msra.mxu0 0.0
    %1529 = vmatprep.subr.mxu0 0.0
    %1530 = vmatpush1.msra.mxu0 0.0
    %1531 = vmatprep.subr.mxu0 0.0
    %1532 = vmatpush1.msra.mxu0 0.0
    %1533 = vmatprep.subr.mxu0 0.0
    %1534 = vmatpush1.msra.mxu0 0.0
    %1535 = vmatprep.subr.mxu0 0.0
    %1536 = vmatpush1.msra.mxu0 0.0
    %1537 = vmatprep.subr.mxu0 0.0
    %1538 = vmatpush1.msra.mxu0 0.0
    %1539 = vmatprep.subr.mxu0 0.0
    %1540 = vmatpush1.msra.mxu0 0.0
    %1541 = vmatprep.subr.mxu0 0.0
    %1542 = vmatpush1.msra.mxu0 0.0
    %1543 = vmatprep.subr.mxu0 0.0
    %1544 = vmatpush1.msra.mxu0 0.0
    %1545 = vmatprep.subr.mxu0 0.0
    %1546 = vmatpush1.msra.mxu0 0.0
    %1547 = vmatprep.subr.mxu0 0.0
    %1548 = vmatpush1.msra.mxu0 0.0
    %1549 = vmatprep.subr.mxu0 0.0
    %1550 = vmatpush1.msra.mxu0 0.0
    %1551 = vmatprep.subr.mxu0 0.0
    %1552 = vmatpush1.msra.mxu0 0.0
    %1553 = vmatprep.subr.mxu0 0.0
    %1554 = vmatpush1.msra.mxu0 0.0
    %1555 = vmatprep.subr.mxu0 0.0
    %1556 = vmatpush1.msra.mxu0 0.0
    %1557 = vmatprep.subr.mxu0 0.0
    %1558 = vmatpush1.msra.mxu0 0.0
    %1559 = vmatprep.subr.mxu0 0.0
    %1560 = vmatpush1.msra.mxu0 0.0
    %1561 = vmatprep.subr.mxu0 0.0
    %1562 = vmatpush1.msra.mxu0 0.0
    %1563 = vmatprep.subr.mxu0 0.0
    %1564 = vmatpush1.msra.mxu0 0.0
    %1565 = vmatprep.subr.mxu0 0.0
    %1566 = vmatpush1.msra.mxu0 0.0
    %1567 = vmatprep.subr.mxu0 0.0
    %1568 = vmatpush1.msra.mxu0 0.0
    %1569 = vmatprep.subr.mxu0 0.0
    %1570 = vmatpush1.msra.mxu0 0.0
    %1571 = vmatprep.subr.mxu0 0.0
    %1572 = vmatpush1.msra.mxu0 0.0
    %1573 = vmatprep.subr.mxu0 0.0
    %1574 = vmatpush1.msra.mxu0 0.0
    %1575 = vmatprep.subr.mxu0 0.0
    %1576 = vmatpush1.msra.mxu0 0.0
    %1577 = vmatprep.subr.mxu0 0.0
    %1578 = vmatpush1.msra.mxu0 0.0
    %1579 = vmatprep.subr.mxu0 0.0
    %1580 = vmatpush1.msra.mxu0 0.0
    %1581 = vmatprep.mubr.f32.mxu0 0.0
    %1582 = vmatmul.mubr.f32.gmra.mrb[0].mxu0 %v1515
    %v1583 = vpop.f32.mrb[0].mxu0
    %v1584 = vadd.f32 0.0, %v1583
    %v1585 = vpop.f32.mrb[0].mxu0
    %1586 = vdwg.mxu0
    %v1588 = vsel %vm109, %v1513, 0
    %1590 = vmatprep.subr.mxu0 0.0
    %1591 = vmatpush1.msra.mxu0 %v93
    %1592 = vmatprep.subr.mxu0 0.0
    %1593 = vmatpush1.msra.mxu0 %v94
    %1594 = vmatprep.subr.mxu0 0.0
    %1595 = vmatpush1.msra.mxu0 %v95
    %1596 = vmatprep.subr.mxu0 0.0
    %1597 = vmatpush1.msra.mxu0 %v96
    %1598 = vmatprep.subr.mxu0 0.0
    %1599 = vmatpush1.msra.mxu0 0.0
    %1600 = vmatprep.subr.mxu0 0.0
    %1601 = vmatpush1.msra.mxu0 0.0
    %1602 = vmatprep.subr.mxu0 0.0
    %1603 = vmatpush1.msra.mxu0 0.0
    %1604 = vmatprep.subr.mxu0 0.0
    %1605 = vmatpush1.msra.mxu0 0.0
    %1606 = vmatprep.subr.mxu0 0.0
    %1607 = vmatpush1.msra.mxu0 0.0
    %1608 = vmatprep.subr.mxu0 0.0
    %1609 = vmatpush1.msra.mxu0 0.0
    %1610 = vmatprep.subr.mxu0 0.0
    %1611 = vmatpush1.msra.mxu0 0.0
    %1612 = vmatprep.subr.mxu0 0.0
    %1613 = vmatpush1.msra.mxu0 0.0
    %1614 = vmatprep.subr.mxu0 0.0
    %1615 = vmatpush1.msra.mxu0 0.0
    %1616 = vmatprep.subr.mxu0 0.0
    %1617 = vmatpush1.msra.mxu0 0.0
    %1618 = vmatprep.subr.mxu0 0.0
    %1619 = vmatpush1.msra.mxu0 0.0
    %1620 = vmatprep.subr.mxu0 0.0
    %1621 = vmatpush1.msra.mxu0 0.0
    %1622 = vmatprep.subr.mxu0 0.0
    %1623 = vmatpush1.msra.mxu0 0.0
    %1624 = vmatprep.subr.mxu0 0.0
    %1625 = vmatpush1.msra.mxu0 0.0
    %1626 = vmatprep.subr.mxu0 0.0
    %1627 = vmatpush1.msra.mxu0 0.0
    %1628 = vmatprep.subr.mxu0 0.0
    %1629 = vmatpush1.msra.mxu0 0.0
    %1630 = vmatprep.subr.mxu0 0.0
    %1631 = vmatpush1.msra.mxu0 0.0
    %1632 = vmatprep.subr.mxu0 0.0
    %1633 = vmatpush1.msra.mxu0 0.0
    %1634 = vmatprep.subr.mxu0 0.0
    %1635 = vmatpush1.msra.mxu0 0.0
    %1636 = vmatprep.subr.mxu0 0.0
    %1637 = vmatpush1.msra.mxu0 0.0
    %1638 = vmatprep.subr.mxu0 0.0
    %1639 = vmatpush1.msra.mxu0 0.0
    %1640 = vmatprep.subr.mxu0 0.0
    %1641 = vmatpush1.msra.mxu0 0.0
    %1642 = vmatprep.subr.mxu0 0.0
    %1643 = vmatpush1.msra.mxu0 0.0
    %1644 = vmatprep.subr.mxu0 0.0
    %1645 = vmatpush1.msra.mxu0 0.0
    %1646 = vmatprep.subr.mxu0 0.0
    %1647 = vmatpush1.msra.mxu0 0.0
    %1648 = vmatprep.subr.mxu0 0.0
    %1649 = vmatpush1.msra.mxu0 0.0
    %1650 = vmatprep.subr.mxu0 0.0
    %1651 = vmatpush1.msra.mxu0 0.0
    %1652 = vmatprep.subr.mxu0 0.0
    %1653 = vmatpush1.msra.mxu0 0.0
    %1654 = vmatprep.mubr.f32.mxu0 0.0
    %1655 = vmatmul.mubr.f32.gmra.mrb[0].mxu0 %v1588
    %v1656 = vpop.f32.mrb[0].mxu0
    %v1657 = vadd.f32 %v1584, %v1656
    %v1658 = vpop.f32.mrb[0].mxu0
    %1659 = vdwg.mxu0
    %v1660 = vadd.f32 %v1657, %v106
    %v1661 = vtanh.pop %v1660
    %s1662 = scalar_lea.vmem [#allocation3], 14
    %v1663 = vld [vmem:[%s1662] sm:$0x3]
    %1664 = vmatprep.subr.mxu0 0.0
    %1665 = vmatpush1.msra.mxu0 %v89
    %1666 = vmatprep.subr.mxu0 0.0
    %1667 = vmatpush1.msra.mxu0 %v90
    %1668 = vmatprep.subr.mxu0 0.0
    %1669 = vmatpush1.msra.mxu0 %v91
    %1670 = vmatprep.subr.mxu0 0.0
    %1671 = vmatpush1.msra.mxu0 %v92
    %1672 = vmatprep.subr.mxu0 0.0
    %1673 = vmatpush1.msra.mxu0 0.0
    %1674 = vmatprep.subr.mxu0 0.0
    %1675 = vmatpush1.msra.mxu0 0.0
    %1676 = vmatprep.subr.mxu0 0.0
    %1677 = vmatpush1.msra.mxu0 0.0
    %1678 = vmatprep.subr.mxu0 0.0
    %1679 = vmatpush1.msra.mxu0 0.0
    %1680 = vmatprep.subr.mxu0 0.0
    %1681 = vmatpush1.msra.mxu0 0.0
    %1682 = vmatprep.subr.mxu0 0.0
    %1683 = vmatpush1.msra.mxu0 0.0
    %1684 = vmatprep.subr.mxu0 0.0
    %1685 = vmatpush1.msra.mxu0 0.0
    %1686 = vmatprep.subr.mxu0 0.0
    %1687 = vmatpush1.msra.mxu0 0.0
    %1688 = vmatprep.subr.mxu0 0.0
    %1689 = vmatpush1.msra.mxu0 0.0
    %1690 = vmatprep.subr.mxu0 0.0
    %1691 = vmatpush1.msra.mxu0 0.0
    %1692 = vmatprep.subr.mxu0 0.0
    %1693 = vmatpush1.msra.mxu0 0.0
    %1694 = vmatprep.subr.mxu0 0.0
    %1695 = vmatpush1.msra.mxu0 0.0
    %1696 = vmatprep.subr.mxu0 0.0
    %1697 = vmatpush1.msra.mxu0 0.0
    %1698 = vmatprep.subr.mxu0 0.0
    %1699 = vmatpush1.msra.mxu0 0.0
    %1700 = vmatprep.subr.mxu0 0.0
    %1701 = vmatpush1.msra.mxu0 0.0
    %1702 = vmatprep.subr.mxu0 0.0
    %1703 = vmatpush1.msra.mxu0 0.0
    %1704 = vmatprep.subr.mxu0 0.0
    %1705 = vmatpush1.msra.mxu0 0.0
    %1706 = vmatprep.subr.mxu0 0.0
    %1707 = vmatpush1.msra.mxu0 0.0
    %1708 = vmatprep.subr.mxu0 0.0
    %1709 = vmatpush1.msra.mxu0 0.0
    %1710 = vmatprep.subr.mxu0 0.0
    %1711 = vmatpush1.msra.mxu0 0.0
    %1712 = vmatprep.subr.mxu0 0.0
    %1713 = vmatpush1.msra.mxu0 0.0
    %1714 = vmatprep.subr.mxu0 0.0
    %1715 = vmatpush1.msra.mxu0 0.0
    %1716 = vmatprep.subr.mxu0 0.0
    %1717 = vmatpush1.msra.mxu0 0.0
    %1718 = vmatprep.subr.mxu0 0.0
    %1719 = vmatpush1.msra.mxu0 0.0
    %1720 = vmatprep.subr.mxu0 0.0
    %1721 = vmatpush1.msra.mxu0 0.0
    %1722 = vmatprep.subr.mxu0 0.0
    %1723 = vmatpush1.msra.mxu0 0.0
    %1724 = vmatprep.subr.mxu0 0.0
    %1725 = vmatpush1.msra.mxu0 0.0
    %1726 = vmatprep.subr.mxu0 0.0
    %1727 = vmatpush1.msra.mxu0 0.0
    %1728 = vmatprep.mubr.f32.mxu0 0.0
    %1729 = vmatmul.mubr.f32.gmra.mrb[0].mxu0 %v1588
    %v1730 = vpop.f32.mrb[0].mxu0
    %v1731 = vadd.f32 0.0, %v1730
    %v1732 = vpop.f32.mrb[0].mxu0
    %1733 = vdwg.mxu0
    %v1734 = vadd.f32 %v1663, %v1731
    %v1735 = vtanh.pop %v1734
    %v1737 = vsel %vm109, %v1661, 0
    %1739 = vmatprep.subr.mxu0 0.0
    %1740 = vmatpush1.msra.mxu0 %v97
    %1741 = vmatprep.subr.mxu0 0.0
    %1742 = vmatpush1.msra.mxu0 %v98
    %1743 = vmatprep.subr.mxu0 0.0
    %1744 = vmatpush1.msra.mxu0 %v99
    %1745 = vmatprep.subr.mxu0 0.0
    %1746 = vmatpush1.msra.mxu0 %v100
    %1747 = vmatprep.subr.mxu0 0.0
    %1748 = vmatpush1.msra.mxu0 0.0
    %1749 = vmatprep.subr.mxu0 0.0
    %1750 = vmatpush1.msra.mxu0 0.0
    %1751 = vmatprep.subr.mxu0 0.0
    %1752 = vmatpush1.msra.mxu0 0.0
    %1753 = vmatprep.subr.mxu0 0.0
    %1754 = vmatpush1.msra.mxu0 0.0
    %1755 = vmatprep.subr.mxu0 0.0
    %1756 = vmatpush1.msra.mxu0 0.0
    %1757 = vmatprep.subr.mxu0 0.0
    %1758 = vmatpush1.msra.mxu0 0.0
    %1759 = vmatprep.subr.mxu0 0.0
    %1760 = vmatpush1.msra.mxu0 0.0
    %1761 = vmatprep.subr.mxu0 0.0
    %1762 = vmatpush1.msra.mxu0 0.0
    %1763 = vmatprep.subr.mxu0 0.0
    %1764 = vmatpush1.msra.mxu0 0.0
    %1765 = vmatprep.subr.mxu0 0.0
    %1766 = vmatpush1.msra.mxu0 0.0
    %1767 = vmatprep.subr.mxu0 0.0
    %1768 = vmatpush1.msra.mxu0 0.0
    %1769 = vmatprep.subr.mxu0 0.0
    %1770 = vmatpush1.msra.mxu0 0.0
    %1771 = vmatprep.subr.mxu0 0.0
    %1772 = vmatpush1.msra.mxu0 0.0
    %1773 = vmatprep.subr.mxu0 0.0
    %1774 = vmatpush1.msra.mxu0 0.0
    %1775 = vmatprep.subr.mxu0 0.0
    %1776 = vmatpush1.msra.mxu0 0.0
    %1777 = vmatprep.subr.mxu0 0.0
    %1778 = vmatpush1.msra.mxu0 0.0
    %1779 = vmatprep.subr.mxu0 0.0
    %1780 = vmatpush1.msra.mxu0 0.0
    %1781 = vmatprep.subr.mxu0 0.0
    %1782 = vmatpush1.msra.mxu0 0.0
    %1783 = vmatprep.subr.mxu0 0.0
    %1784 = vmatpush1.msra.mxu0 0.0
    %1785 = vmatprep.subr.mxu0 0.0
    %1786 = vmatpush1.msra.mxu0 0.0
    %1787 = vmatprep.subr.mxu0 0.0
    %1788 = vmatpush1.msra.mxu0 0.0
    %1789 = vmatprep.subr.mxu0 0.0
    %1790 = vmatpush1.msra.mxu0 0.0
    %1791 = vmatprep.subr.mxu0 0.0
    %1792 = vmatpush1.msra.mxu0 0.0
    %1793 = vmatprep.subr.mxu0 0.0
    %1794 = vmatpush1.msra.mxu0 0.0
    %1795 = vmatprep.subr.mxu0 0.0
    %1796 = vmatpush1.msra.mxu0 0.0
    %1797 = vmatprep.subr.mxu0 0.0
    %1798 = vmatpush1.msra.mxu0 0.0
    %1799 = vmatprep.subr.mxu0 0.0
    %1800 = vmatpush1.msra.mxu0 0.0
    %1801 = vmatprep.subr.mxu0 0.0
    %1802 = vmatpush1.msra.mxu0 0.0
    %1803 = vmatprep.mubr.f32.mxu0 0.0
    %1804 = vmatmul.mubr.f32.gmra.mrb[0].mxu0 %v1737
    %v1805 = vpop.f32.mrb[0].mxu0
    %v1806 = vadd.f32 0.0, %v1805
    %v1807 = vpop.f32.mrb[0].mxu0
    %1808 = vdwg.mxu0
    %v1810 = vsel %vm109, %v1735, 0
    %1812 = vmatprep.subr.mxu0 0.0
    %1813 = vmatpush1.msra.mxu0 %v93
    %1814 = vmatprep.subr.mxu0 0.0
    %1815 = vmatpush1.msra.mxu0 %v94
    %1816 = vmatprep.subr.mxu0 0.0
    %1817 = vmatpush1.msra.mxu0 %v95
    %1818 = vmatprep.subr.mxu0 0.0
    %1819 = vmatpush1.msra.mxu0 %v96
    %1820 = vmatprep.subr.mxu0 0.0
    %1821 = vmatpush1.msra.mxu0 0.0
    %1822 = vmatprep.subr.mxu0 0.0
    %1823 = vmatpush1.msra.mxu0 0.0
    %1824 = vmatprep.subr.mxu0 0.0
    %1825 = vmatpush1.msra.mxu0 0.0
    %1826 = vmatprep.subr.mxu0 0.0
    %1827 = vmatpush1.msra.mxu0 0.0
    %1828 = vmatprep.subr.mxu0 0.0
    %1829 = vmatpush1.msra.mxu0 0.0
    %1830 = vmatprep.subr.mxu0 0.0
    %1831 = vmatpush1.msra.mxu0 0.0
    %1832 = vmatprep.subr.mxu0 0.0
    %1833 = vmatpush1.msra.mxu0 0.0
    %1834 = vmatprep.subr.mxu0 0.0
    %1835 = vmatpush1.msra.mxu0 0.0
    %1836 = vmatprep.subr.mxu0 0.0
    %1837 = vmatpush1.msra.mxu0 0.0
    %1838 = vmatprep.subr.mxu0 0.0
    %1839 = vmatpush1.msra.mxu0 0.0
    %1840 = vmatprep.subr.mxu0 0.0
    %1841 = vmatpush1.msra.mxu0 0.0
    %1842 = vmatprep.subr.mxu0 0.0
    %1843 = vmatpush1.msra.mxu0 0.0
    %1844 = vmatprep.subr.mxu0 0.0
    %1845 = vmatpush1.msra.mxu0 0.0
    %1846 = vmatprep.subr.mxu0 0.0
    %1847 = vmatpush1.msra.mxu0 0.0
    %1848 = vmatprep.subr.mxu0 0.0
    %1849 = vmatpush1.msra.mxu0 0.0
    %1850 = vmatprep.subr.mxu0 0.0
    %1851 = vmatpush1.msra.mxu0 0.0
    %1852 = vmatprep.subr.mxu0 0.0
    %1853 = vmatpush1.msra.mxu0 0.0
    %1854 = vmatprep.subr.mxu0 0.0
    %1855 = vmatpush1.msra.mxu0 0.0
    %1856 = vmatprep.subr.mxu0 0.0
    %1857 = vmatpush1.msra.mxu0 0.0
    %1858 = vmatprep.subr.mxu0 0.0
    %1859 = vmatpush1.msra.mxu0 0.0
    %1860 = vmatprep.subr.mxu0 0.0
    %1861 = vmatpush1.msra.mxu0 0.0
    %1862 = vmatprep.subr.mxu0 0.0
    %1863 = vmatpush1.msra.mxu0 0.0
    %1864 = vmatprep.subr.mxu0 0.0
    %1865 = vmatpush1.msra.mxu0 0.0
    %1866 = vmatprep.subr.mxu0 0.0
    %1867 = vmatpush1.msra.mxu0 0.0
    %1868 = vmatprep.subr.mxu0 0.0
    %1869 = vmatpush1.msra.mxu0 0.0
    %1870 = vmatprep.subr.mxu0 0.0
    %1871 = vmatpush1.msra.mxu0 0.0
    %1872 = vmatprep.subr.mxu0 0.0
    %1873 = vmatpush1.msra.mxu0 0.0
    %1874 = vmatprep.subr.mxu0 0.0
    %1875 = vmatpush1.msra.mxu0 0.0
    %1876 = vmatprep.mubr.f32.mxu0 0.0
    %1877 = vmatmul.mubr.f32.gmra.mrb[0].mxu0 %v1810
    %v1878 = vpop.f32.mrb[0].mxu0
    %v1879 = vadd.f32 %v1806, %v1878
    %v1880 = vpop.f32.mrb[0].mxu0
    %1881 = vdwg.mxu0
    %v1882 = vadd.f32 %v1879, %v106
    %v1883 = vtanh.pop %v1882
    %vm1884 = vcmask 254976
    %v1885 = vsel %vm1884, %v1883, 0.0
    %1886 = vadd.xlane.f32.xlu0 %v1885
    %v1887 = vpop.xlane.xlu0 %1886
    %v1888 = vrcp.pop 32.0
    %v1889 = vmul.f32 %v1887, %v1888
    %v1890 = vsub.f32 %v1883, %v1889
    %v1891 = vmul.f32 %v1890, %v1890
    %v1892 = vsel %vm1884, %v1891, 0.0
    %1893 = vadd.xlane.f32.xlu0 %v1892
    %v1894 = vpop.xlane.xlu0 %1893
    %v1895 = vmul.f32 %v1894, %v1888
    %v1896 = vadd.f32 %v1895, 1e-05
    %v1897 = vrsqrt.pop %v1896
    %v1898 = vmul.f32 %v1890, %v1897
    %v1899 = vld [vmem:[%s5] sm:$0x1]
    %v1901 = vlaneseq
    %v1902 = vshrl.u32 %v1901, 7
    %v1903 = vsub.s32 0, %v1902
    %v1904 = vrot.slane %v1899, %v1903
    %v1906 = vmul.f32 %v1898, %v1904
    %v1907 = vld [vmem:[%s6] sm:$0x1]
    %v1909 = vlaneseq
    %v1910 = vshrl.u32 %v1909, 7
    %v1911 = vsub.s32 0, %v1910
    %v1912 = vrot.slane %v1907, %v1911
    %v1914 = vadd.f32 %v1906, %v1912
    %v1915 = vld [vmem:[%s7] sm:$0x1]
    %v1917 = vlaneseq
    %v1918 = vshrl.u32 %v1917, 7
    %v1919 = vsub.s32 0, %v1918
    %v1920 = vrot.slane %v1915, %v1919
    %v1921 = vld [vmem:[#allocation2] sm:$0x1]
    %v1923 = vlaneseq
    %v1924 = vshrl.u32 %v1923, 7
    %v1925 = vsub.s32 0, %v1924
    %v1926 = vrot.slane %v1921, %v1925
    %1927 = vset.pattern.permute.xlu0 0
    %1928 = vperm.xlu0 %1927, %v1926
    %v1929 = vpop.permute.xlu0 %1928
    %v1931 = vsel %vm109, %v1920, 0
    %v1934 = vsel %vm109, %v1914, 0
    %1936 = vmatprep.subr.mxu0 0.0
    %1937 = vmatpush1.xpose.msra.mxu0 %v1934
    %1938 = vmatprep.subr.mxu0 0.0
    %1939 = vmatpush1.xpose.msra.mxu0 0.0
    %1940 = vmatprep.subr.mxu0 0.0
    %1941 = vmatpush1.xpose.msra.mxu0 0.0
    %1942 = vmatprep.subr.mxu0 0.0
    %1943 = vmatpush1.xpose.msra.mxu0 0.0
    %1944 = vmatprep.subr.mxu0 0.0
    %1945 = vmatpush1.xpose.msra.mxu0 0.0
    %1946 = vmatprep.subr.mxu0 0.0
    %1947 = vmatpush1.xpose.msra.mxu0 0.0
    %1948 = vmatprep.subr.mxu0 0.0
    %1949 = vmatpush1.xpose.msra.mxu0 0.0
    %1950 = vmatprep.subr.mxu0 0.0
    %1951 = vmatpush1.xpose.msra.mxu0 0.0
    %1952 = vmatprep.subr.mxu0 0.0
    %1953 = vmatpush1.xpose.msra.mxu0 0.0
    %1954 = vmatprep.subr.mxu0 0.0
    %1955 = vmatpush1.xpose.msra.mxu0 0.0
    %1956 = vmatprep.subr.mxu0 0.0
    %1957 = vmatpush1.xpose.msra.mxu0 0.0
    %1958 = vmatprep.subr.mxu0 0.0
    %1959 = vmatpush1.xpose.msra.mxu0 0.0
    %1960 = vmatprep.subr.mxu0 0.0
    %1961 = vmatpush1.xpose.msra.mxu0 0.0
    %1962 = vmatprep.subr.mxu0 0.0
    %1963 = vmatpush1.xpose.msra.mxu0 0.0
    %1964 = vmatprep.subr.mxu0 0.0
    %1965 = vmatpush1.xpose.msra.mxu0 0.0
    %1966 = vmatprep.subr.mxu0 0.0
    %1967 = vmatpush1.xpose.msra.mxu0 0.0
    %1968 = vmatprep.subr.mxu0 0.0
    %1969 = vmatpush1.xpose.msra.mxu0 0.0
    %1970 = vmatprep.subr.mxu0 0.0
    %1971 = vmatpush1.xpose.msra.mxu0 0.0
    %1972 = vmatprep.subr.mxu0 0.0
    %1973 = vmatpush1.xpose.msra.mxu0 0.0
    %1974 = vmatprep.subr.mxu0 0.0
    %1975 = vmatpush1.xpose.msra.mxu0 0.0
    %1976 = vmatprep.subr.mxu0 0.0
    %1977 = vmatpush1.xpose.msra.mxu0 0.0
    %1978 = vmatprep.subr.mxu0 0.0
    %1979 = vmatpush1.xpose.msra.mxu0 0.0
    %1980 = vmatprep.subr.mxu0 0.0
    %1981 = vmatpush1.xpose.msra.mxu0 0.0
    %1982 = vmatprep.subr.mxu0 0.0
    %1983 = vmatpush1.xpose.msra.mxu0 0.0
    %1984 = vmatprep.subr.mxu0 0.0
    %1985 = vmatpush1.xpose.msra.mxu0 0.0
    %1986 = vmatprep.subr.mxu0 0.0
    %1987 = vmatpush1.xpose.msra.mxu0 0.0
    %1988 = vmatprep.subr.mxu0 0.0
    %1989 = vmatpush1.xpose.msra.mxu0 0.0
    %1990 = vmatprep.subr.mxu0 0.0
    %1991 = vmatpush1.xpose.msra.mxu0 0.0
    %1992 = vmatprep.subr.mxu0 0.0
    %1993 = vmatpush1.xpose.msra.mxu0 0.0
    %1994 = vmatprep.subr.mxu0 0.0
    %1995 = vmatpush1.xpose.msra.mxu0 0.0
    %1996 = vmatprep.subr.mxu0 0.0
    %1997 = vmatpush1.xpose.msra.mxu0 0.0
    %1998 = vmatprep.subr.mxu0 0.0
    %1999 = vmatpush1.xpose.msra.mxu0 0.0
    %2000 = vmatprep.mubr.f32.mxu0 0.0
    %2001 = vmatmul.mubr.f32.gmra.mrb[0].mxu0 %v1931
    %v2002 = vpop.f32.mrb[0].mxu0
    %v2003 = vadd.f32 %v1929, %v2002
    %v2004 = vpop.f32.mrb[0].mxu0
    %2005 = vdwg.mxu0
    %vm2006 = vcmask 15360
    %2007 = vst.msk [vmem:[%s9] sm:$0xff] %vm2006, %v2003
    // Predicated region
    $region54: #{tpu_custom_call.1} parent=1 // pred_check
      _
    $region55: #{tpu_custom_call.1} parent=1 // pred_check_branch
      %2009 = sbr.rel (0) target = $region57
    $region56: #{tpu_custom_call.1} parent=1 // pred_region
      _
    $region57: #{tpu_custom_call.1} parent=1 // pred_fallthru
      _
    // Predicated region
    $region58: #{tpu_custom_call.1} parent=1 // pred_check
      _
    $region59: #{tpu_custom_call.1} parent=1 // pred_check_branch
      %2011 = sbr.rel (0) target = $region61
    $region60: #{tpu_custom_call.1} parent=1 // pred_region
      _
    $region61: #{tpu_custom_call.1} parent=1 // pred_fallthru
      _
    %2012 = vsyncpa [#allocation4], 1
    %2013 = vsyncpa [#allocation6], 1
    %2014 = vsyncpa [#allocation9], 1

</llo_original>
